<compile_context>
chip_gen: v6e
topology: v6e:2x2x1
jax: 0.10.0
libtpu: 0.0.40
codegen_flags: <defaults>
</compile_context>

<pallas_src>
import functools

import jax
import jax.numpy as jnp
from jax import lax
from jax.experimental import pallas as pl
from jax.experimental.pallas import tpu as pltpu


# --------------------- Kernel 1: fused 1x1 qkv + dilated dwconv ---------------- #

def _qkv_dw_kernel(x_ref, m_ref, wq_ref, bq_ref, wd_ref, bd_ref, o_ref, pad_ref,
                   *, W, d, pad):
    Cg, hw = o_ref.shape

    # fused 1x1 conv: (Cg, C) @ (C, hw) on the MXU, bf16 operands, f32 accumulation.
    xb = x_ref[...].astype(jnp.bfloat16)
    qkv = (jnp.dot(wq_ref[...], xb, preferred_element_type=jnp.float32)
           + bq_ref[...])

    # Stage into a zero-padded flattened line buffer (halo = d rows + d cols),
    # so the 9 dilated taps become static lane-offset slices.
    zpad = jnp.zeros((Cg, pad), jnp.float32)
    pad_ref[:, pl.ds(0, pad)] = zpad
    pad_ref[:, pl.ds(pad + hw, pad)] = zpad
    pad_ref[:, pl.ds(pad, hw)] = qkv

    wd = wd_ref[...]          # (Cg, 9) depthwise taps
    m = m_ref[...]            # (2, hw) column-validity masks
    acc = jnp.zeros((Cg, hw), jnp.float32)
    for dj in range(3):       # column mask factored out of the di loop
        part = jnp.zeros((Cg, hw), jnp.float32)
        for di in range(3):
            tap = pad_ref[:, pl.ds(di * d * W + dj * d, hw)]
            w_tap = wd[:, 3 * di + dj: 3 * di + dj + 1]       # (Cg, 1)
            part = part + w_tap * tap
        if dj == 0:           # left-shifted column: invalid where j < d
            part = part * m[0:1, :]
        elif dj == 2:         # right-shifted column: invalid where j >= W - d
            part = part * m[1:2, :]
        acc = acc + part
    o_ref[...] = (acc + bd_ref[...]).astype(o_ref.dtype)


def fused_qkv_dwconv(x_flat, colmask, wqkv, bqkv, wdw, bdw, *, cgroups, W, d, pad):
    B, C, hw = x_flat.shape
    C3 = wqkv.shape[0]
    Cg = C3 // cgroups
    kern = functools.partial(_qkv_dw_kernel, W=W, d=d, pad=pad)
    cost = pl.CostEstimate(
        flops=2 * B * C3 * C * hw + 18 * B * C3 * hw,
        transcendentals=0,
        bytes_accessed=B * C * hw * 4 + B * C3 * hw * 2
                       + C3 * C * 2 + C3 * (9 + 2) * 4 + 2 * hw * 4)
    return pl.pallas_call(
        kern,
        out_shape=jax.ShapeDtypeStruct((B, C3, hw), jnp.bfloat16),
        grid=(B, cgroups),
        in_specs=[
            pl.BlockSpec((None, C, hw), lambda b, g: (b, 0, 0)),   # x resident over g
            pl.BlockSpec((2, hw), lambda b, g: (0, 0)),            # column masks
            pl.BlockSpec((Cg, C), lambda b, g: (g, 0)),            # bf16 1x1 weights
            pl.BlockSpec((Cg, 1), lambda b, g: (g, 0)),
            pl.BlockSpec((Cg, 9), lambda b, g: (g, 0)),
            pl.BlockSpec((Cg, 1), lambda b, g: (g, 0)),
        ],
        out_specs=pl.BlockSpec((None, Cg, hw), lambda b, g: (b, g, 0)),
        scratch_shapes=[pltpu.VMEM((Cg, hw + 2 * pad), jnp.float32)],
        compiler_params=pltpu.CompilerParams(
            dimension_semantics=("parallel", "parallel"),
            vmem_limit_bytes=48 * 1024 * 1024,
        ),
        cost_estimate=cost,
    )(x_flat, colmask, wqkv, bqkv, wdw, bdw)


# ---- Kernel 2: attention probs fused with project_out weights (-> Weff) ------- #

def _attn_weff_kernel(temp_ref, qk_ref, wp_ref, weff_ref,
                      gram_sc, qss_sc, kss_sc, *, num_heads):
    t = pl.program_id(1)
    _, C, T = qk_ref.shape
    ch = C // num_heads

    @pl.when(t == 0)
    def _():
        gram_sc[...] = jnp.zeros_like(gram_sc)
        qss_sc[...] = jnp.zeros_like(qss_sc)
        kss_sc[...] = jnp.zeros_like(kss_sc)

    q = qk_ref[0]                                       # (C, T) bf16
    k = qk_ref[1]                                       # (C, T) bf16
    # one full CxC Gram per tile (single wide MXU matmul, contracting hw)
    gram_sc[...] += lax.dot_general(q, k, (((1,), (1,)), ((), ())),
                                    preferred_element_type=jnp.float32)
    qf = q.astype(jnp.float32)
    kf = k.astype(jnp.float32)
    qss_sc[...] += jnp.sum(qf * qf, axis=1, keepdims=True)   # (C, 1) lane reduce
    kss_sc[...] += jnp.sum(kf * kf, axis=1, keepdims=True)   # (C, 1) lane reduce

    @pl.when(t == pl.num_programs(1) - 1)
    def _():
        eps2 = 1e-24
        rq = lax.rsqrt(jnp.maximum(qss_sc[...], eps2))        # (C, 1)
        rk = lax.rsqrt(jnp.maximum(kss_sc[...], eps2))        # (C, 1)
        # column scaling by rk via a diag matmul (avoids an in-kernel transpose)
        rows = lax.broadcasted_iota(jnp.int32, (C, C), 0)
        cols = lax.broadcasted_iota(jnp.int32, (C, C), 1)
        diag_rk = jnp.where(rows == cols, rk, 0.0)            # (C, C)
        g = jnp.dot(gram_sc[...] * rq, diag_rk,
                    preferred_element_type=jnp.float32)       # cosine Gram, (C, C)
        wp = wp_ref[...]                                      # (C, C) project_out weight
        for h in range(num_heads):
            s, e = h * ch, (h + 1) * ch
            logits = g[s:e, s:e] * temp_ref[h]
            logits = logits - jnp.max(logits, axis=-1, keepdims=True)
            p = jnp.exp(logits)
            p = p * pl.reciprocal(jnp.sum(p, axis=-1, keepdims=True), approx=True)
            # fold project_out:  Weff[:, s:e] = proj_w[:, s:e] @ softmax_h
            weff_ref[:, s:e] = jnp.dot(wp[:, s:e], p,
                                       preferred_element_type=jnp.float32)


def attn_weff(qkv3, temperature, proj_w, *, num_heads, hw_tile):
    B, _, C, hw = qkv3.shape
    nt = hw // hw_tile
    kern = functools.partial(_attn_weff_kernel, num_heads=num_heads)
    cost = pl.CostEstimate(
        flops=2 * B * C * C * hw + 6 * B * C * hw,
        transcendentals=B * C * (C // num_heads),
        bytes_accessed=B * 2 * C * hw * 2 + B * C * C * 4 + C * C * 4)
    return pl.pallas_call(
        kern,
        out_shape=jax.ShapeDtypeStruct((B, C, C), jnp.float32),
        grid=(B, nt),
        in_specs=[
            pl.BlockSpec(memory_space=pltpu.MemorySpace.SMEM),                  # temperature
            pl.BlockSpec((None, 2, C, hw_tile), lambda b, t: (b, 0, 0, t)),     # q‖k, one DMA
            pl.BlockSpec((C, C), lambda b, t: (0, 0)),                          # proj_w
        ],
        out_specs=pl.BlockSpec((None, C, C), lambda b, t: (b, 0, 0)),
        scratch_shapes=[
            pltpu.VMEM((C, C), jnp.float32),   # Gram accumulator
            pltpu.VMEM((C, 1), jnp.float32),   # sum(q^2) per channel
            pltpu.VMEM((C, 1), jnp.float32),   # sum(k^2) per channel
        ],
        compiler_params=pltpu.CompilerParams(
            dimension_semantics=("parallel", "arbitrary")),
        cost_estimate=cost,
    )(temperature, qkv3, proj_w)


# ---------------- Kernel 3: single (C,C) @ (C,T) matmul + bias ----------------- #

def _v_proj_kernel(w_ref, v_ref, bp_ref, o_ref):
    wb = w_ref[...].astype(jnp.bfloat16)               # (C, C) effective weights
    o_ref[...] = (jnp.dot(wb, v_ref[...], preferred_element_type=jnp.float32)
                  + bp_ref[...]).astype(o_ref.dtype)


def v_project(weff, qkv3, bproj, *, hw_tile):
    B, _, C, hw = qkv3.shape
    nt = hw // hw_tile
    cost = pl.CostEstimate(
        flops=2 * B * C * C * hw,
        transcendentals=0,
        bytes_accessed=B * C * hw * 2 + B * C * C * 4 + B * C * hw * 4)
    return pl.pallas_call(
        _v_proj_kernel,
        out_shape=jax.ShapeDtypeStruct((B, C, hw), jnp.float32),
        grid=(B, nt),
        in_specs=[
            pl.BlockSpec((None, C, C), lambda b, t: (b, 0, 0)),                 # Weff
            pl.BlockSpec((None, None, C, hw_tile), lambda b, t: (b, 2, 0, t)),  # v channels
            pl.BlockSpec((C, 1), lambda b, t: (0, 0)),                          # proj bias
        ],
        out_specs=pl.BlockSpec((None, C, hw_tile), lambda b, t: (b, 0, t)),
        compiler_params=pltpu.CompilerParams(
            dimension_semantics=("parallel", "parallel")),
        cost_estimate=cost,
    )(weff, qkv3, bproj)


# ---------------------------------- Forward ------------------------------------ #

def _pick_hw_tile(hw, target):
    if hw <= target:
        return hw
    t = target - (target % 128)
    while t > 0:
        if hw % t == 0:
            break
        t -= 128
    if t <= 0:
        t = hw
    assert t == hw or (t % 128 == 0 and hw % t == 0), "hw tile violates lane tiling"
    return t


def attention_dilated_forward(x, params, num_heads, dilation, *,
                              cgroups=1, hw_tile_target=32768):
    """x: (B, C, H, W) NCHW float32 -> (B, C, H, W)."""
    B, C, H, W = x.shape
    C3 = 3 * C
    hw = H * W
    d = dilation
    assert C % num_heads == 0 and C3 % cgroups == 0

    x_flat = x.reshape(B, C, hw)                       # free reshape, stays NCHW

    # column-validity masks for the +/- dilation column taps (built once, outside)
    col = jnp.arange(hw, dtype=jnp.int32) % W
    colmask = jnp.stack([
        (col >= d).astype(jnp.float32),                # left-shifted taps valid
        (col < W - d).astype(jnp.float32),             # right-shifted taps valid
    ], axis=0)                                         # (2, hw)

    qkv_w = params["qkv_w"].astype(jnp.bfloat16)       # bf16 MXU operands for the 1x1
    qkv_b = params["qkv_b"].reshape(C3, 1)
    dw_b = params["dw_b"].reshape(C3, 1)
    dw_w = params["dw_w"].reshape(C3, 9)
    proj_b = params["proj_b"].reshape(C, 1)
    pad = d * W + d

    # fused: qkv = dwconv_dilated(conv1x1(x)), output (B, 3C, hw) in bf16
    qkv = fused_qkv_dwconv(x_flat, colmask, qkv_w, qkv_b, dw_w, dw_b,
                           cgroups=cgroups, W=W, d=d, pad=pad)

    qkv3 = qkv.reshape(B, 3, C, hw)                    # free reshape (q/k/v views)
    t_hw = _pick_hw_tile(hw, hw_tile_target)

    # per-batch effective weights Weff = concat_h(proj_w[:, h] @ softmax_h), (B, C, C)
    weff = attn_weff(qkv3, params["temperature"], params["proj_w"],
                     num_heads=num_heads, hw_tile=t_hw)

    # out = Weff @ v + proj_bias, per hw tile
    out_flat = v_project(weff, qkv3, proj_b, hw_tile=t_hw)       # (B, C, hw)
    return out_flat.reshape(B, C, H, W)


# ------------------------- Pure-JAX reference check ---------------------------- #

def reference_forward(x, params, num_heads, dilation):
    B, C, H, W = x.shape
    C3 = 3 * C
    d = dilation
    hi = jax.lax.Precision.HIGHEST

    qkv = jax.lax.conv_general_dilated(
        x, params["qkv_w"][:, :, None, None],
        window_strides=(1, 1), padding="VALID",
        dimension_numbers=("NCHW", "OIHW", "NCHW"), precision=hi,
    ) + params["qkv_b"][None, :, None, None]

    dw_hwio = jnp.transpose(params["dw_w"], (1, 2, 0))[:, :, None, :]   # (3,3,1,3C)
    qkv = jax.lax.conv_general_dilated(
        qkv, dw_hwio, window_strides=(1, 1), padding=[(d, d), (d, d)],
        rhs_dilation=(d, d), feature_group_count=C3,
        dimension_numbers=("NCHW", "HWIO", "NCHW"), precision=hi,
    ) + params["dw_b"][None, :, None, None]

    q, k, v = jnp.split(qkv, 3, axis=1)
    ch = C // num_heads

    def rearr(t):
        return t.reshape(B, num_heads, ch, H * W)

    def l2n(t):
        n = jnp.sqrt(jnp.sum(t * t, axis=-1, keepdims=True))
        return t / jnp.maximum(n, 1e-12)

    q, k, v = rearr(q), rearr(k), rearr(v)
    q, k = l2n(q), l2n(k)
    attn = jnp.einsum("bhcn,bhdn->bhcd", q, k, precision=hi)
    attn = attn * params["temperature"][None, :, None, None]
    attn = jax.nn.softmax(attn, axis=-1)
    out = jnp.einsum("bhcd,bhdn->bhcn", attn, v, precision=hi)
    out = out.reshape(B, C, H, W)
    out = jax.lax.conv_general_dilated(
        out, params["proj_w"][:, :, None, None],
        window_strides=(1, 1), padding="VALID",
        dimension_numbers=("NCHW", "OIHW", "NCHW"), precision=hi,
    ) + params["proj_b"][None, :, None, None]
    return out


# ------------------------------------ Main -------------------------------------- #

if __name__ == "__main__":
    B, C, H, W = 2, 32, 16, 16
    num_heads = 4
    dilation = 2   # the module's `stride` arg: used as dilation AND padding

    key = jax.random.PRNGKey(0)
    ks = jax.random.split(key, 7)
    params = {
        "qkv_w": 0.1 * jax.random.normal(ks[0], (3 * C, C), jnp.float32),   # (out, in)
        "qkv_b": 0.1 * jax.random.normal(ks[1], (3 * C,), jnp.float32),
        "dw_w": 0.1 * jax.random.normal(ks[2], (3 * C, 3, 3), jnp.float32),
        "dw_b": 0.1 * jax.random.normal(ks[3], (3 * C,), jnp.float32),
        "proj_w": 0.1 * jax.random.normal(ks[4], (C, C), jnp.float32),      # (out, in)
        "proj_b": 0.1 * jax.random.normal(ks[5], (C,), jnp.float32),
        "temperature": jnp.ones((num_heads,), jnp.float32),
    }
    x = jax.random.normal(ks[6], (B, C, H, W), jnp.float32)

    out = attention_dilated_forward(x, params, num_heads, dilation)
    out = jax.block_until_ready(out)
    assert out.shape == (B, C, H, W)

    ref = reference_forward(x, params, num_heads, dilation)
    err = float(jnp.max(jnp.abs(out - ref)))
    if not bool(jnp.allclose(out, ref, rtol=3e-2, atol=3e-2)):
        raise AssertionError(f"kernel/reference mismatch, max abs err = {err}")

    print("KERNEL_OK")
</pallas_src>

<mosaic_0001>
module attributes {stable_mosaic.version = 11 : i64} {
  func.func @_qkv_dw_kernel(%arg0: i32, %arg1: i32, %arg2: memref<1x32x256xf32, #tpu.memory_space<vmem>>, %arg3: memref<2x256xf32, #tpu.memory_space<vmem>>, %arg4: memref<96x32xbf16, #tpu.memory_space<vmem>>, %arg5: memref<96x1xf32, #tpu.memory_space<vmem>>, %arg6: memref<96x9xf32, #tpu.memory_space<vmem>>, %arg7: memref<96x1xf32, #tpu.memory_space<vmem>>, %arg8: memref<1x96x256xbf16, #tpu.memory_space<vmem>>, %arg9: memref<96x324xf32, #tpu.memory_space<vmem>>) attributes {dimension_semantics = [#tpu.dimension_semantics<parallel>, #tpu.dimension_semantics<parallel>], iteration_bounds = array<i64: 2, 1>, scalar_prefetch = 0 : i64, scratch_operands = 1 : i64, tpu.core_type = #tpu.core_type<tc>, window_params = [{transform_indices = @transform_0, window_bounds = array<i64: 1, 32, 256>}, {pipeline_mode = #tpu.pipeline_mode<synchronous>, transform_indices = @transform_1, window_bounds = array<i64: 2, 256>}, {transform_indices = @transform_2, window_bounds = array<i64: 96, 32>}, {transform_indices = @transform_3, window_bounds = array<i64: 96, 1>}, {transform_indices = @transform_4, window_bounds = array<i64: 96, 9>}, {transform_indices = @transform_5, window_bounds = array<i64: 96, 1>}, {transform_indices = @transform_6, window_bounds = array<i64: 1, 96, 256>}]} {
    %c0 = arith.constant 0 : index
    %c0_0 = arith.constant 0 : index
    %c0_1 = arith.constant 0 : index
    %0 = vector.load %arg2[%c0, %c0_0, %c0_1] : memref<1x32x256xf32, #tpu.memory_space<vmem>>, vector<1x32x256xf32>
    %1 = vector.shape_cast %0 : vector<1x32x256xf32> to vector<32x256xf32>
    %2 = arith.truncf %1 : vector<32x256xf32> to vector<32x256xbf16>
    %c0_2 = arith.constant 0 : index
    %c0_3 = arith.constant 0 : index
    %3 = vector.load %arg4[%c0_2, %c0_3] : memref<96x32xbf16, #tpu.memory_space<vmem>>, vector<96x32xbf16>
    %cst = arith.constant dense<0.000000e+00> : vector<96x256xf32>
    %4 = tpu.matmul %3, %2, %cst {dimension_numbers = #tpu.dot_dimension_numbers<[1], [0], [0], [1], [0, 0, 1, 1], [], []>} : vector<96x32xbf16>, vector<32x256xbf16>, vector<96x256xf32> -> vector<96x256xf32>
    %c0_4 = arith.constant 0 : index
    %c0_5 = arith.constant 0 : index
    %5 = vector.load %arg5[%c0_4, %c0_5] : memref<96x1xf32, #tpu.memory_space<vmem>>, vector<96x1xf32>
    %6 = vector.broadcast %5 : vector<96x1xf32> to vector<96x256xf32>
    %7 = arith.addf %4, %6 : vector<96x256xf32>
    %cst_6 = arith.constant 0.000000e+00 : f32
    %8 = vector.broadcast %cst_6 : f32 to vector<96x34xf32>
    %c0_7 = arith.constant 0 : index
    %c0_8 = arith.constant 0 : index
    %9 = vector.load %arg9[%c0_7, %c0_8] : memref<96x324xf32, #tpu.memory_space<vmem>>, vector<96x34xf32>
    tpu.vector_store %arg9[%c0_7, %c0_8], %8 {strides = array<i32>} : memref<96x324xf32, #tpu.memory_space<vmem>>, vector<96x34xf32>,
    %c0_9 = arith.constant 0 : index
    %c290 = arith.constant 290 : index
    %10 = vector.load %arg9[%c0_9, %c290] : memref<96x324xf32, #tpu.memory_space<vmem>>, vector<96x34xf32>
    tpu.vector_store %arg9[%c0_9, %c290], %8 {strides = array<i32>} : memref<96x324xf32, #tpu.memory_space<vmem>>, vector<96x34xf32>,
    %c0_10 = arith.constant 0 : index
    %c34 = arith.constant 34 : index
    %11 = vector.load %arg9[%c0_10, %c34] : memref<96x324xf32, #tpu.memory_space<vmem>>, vector<96x256xf32>
    tpu.vector_store %arg9[%c0_10, %c34], %7 {strides = array<i32>} : memref<96x324xf32, #tpu.memory_space<vmem>>, vector<96x256xf32>,
    %c0_11 = arith.constant 0 : index
    %c0_12 = arith.constant 0 : index
    %12 = vector.load %arg6[%c0_11, %c0_12] : memref<96x9xf32, #tpu.memory_space<vmem>>, vector<96x9xf32>
    %c0_13 = arith.constant 0 : index
    %c0_14 = arith.constant 0 : index
    %13 = vector.load %arg3[%c0_13, %c0_14] : memref<2x256xf32, #tpu.memory_space<vmem>>, vector<2x256xf32>
    %cst_15 = arith.constant 0.000000e+00 : f32
    %14 = vector.broadcast %cst_15 : f32 to vector<96x256xf32>
    %cst_16 = arith.constant 0.000000e+00 : f32
    %15 = vector.broadcast %cst_16 : f32 to vector<96x256xf32>
    %c0_17 = arith.constant 0 : index
    %c0_18 = arith.constant 0 : index
    %16 = vector.load %arg9[%c0_17, %c0_18] : memref<96x324xf32, #tpu.memory_space<vmem>>, vector<96x256xf32>
    %17 = vector.extract_strided_slice %12 {offsets = [0, 0], sizes = [96, 1], strides = [1, 1]} : vector<96x9xf32> to vector<96x1xf32>
    %18 = vector.broadcast %17 : vector<96x1xf32> to vector<96x256xf32>
    %19 = arith.mulf %18, %16 : vector<96x256xf32>
    %20 = arith.addf %15, %19 : vector<96x256xf32>
    %c0_19 = arith.constant 0 : index
    %c32 = arith.constant 32 : index
    %21 = vector.load %arg9[%c0_19, %c32] : memref<96x324xf32, #tpu.memory_space<vmem>>, vector<96x256xf32>
    %22 = vector.extract_strided_slice %12 {offsets = [0, 3], sizes = [96, 1], strides = [1, 1]} : vector<96x9xf32> to vector<96x1xf32>
    %23 = vector.broadcast %22 : vector<96x1xf32> to vector<96x256xf32>
    %24 = arith.mulf %23, %21 : vector<96x256xf32>
    %25 = arith.addf %20, %24 : vector<96x256xf32>
    %c0_20 = arith.constant 0 : index
    %c64 = arith.constant 64 : index
    %26 = vector.load %arg9[%c0_20, %c64] : memref<96x324xf32, #tpu.memory_space<vmem>>, vector<96x256xf32>
    %27 = vector.extract_strided_slice %12 {offsets = [0, 6], sizes = [96, 1], strides = [1, 1]} : vector<96x9xf32> to vector<96x1xf32>
    %28 = vector.broadcast %27 : vector<96x1xf32> to vector<96x256xf32>
    %29 = arith.mulf %28, %26 : vector<96x256xf32>
    %30 = arith.addf %25, %29 : vector<96x256xf32>
    %31 = vector.extract_strided_slice %13 {offsets = [0, 0], sizes = [1, 256], strides = [1, 1]} : vector<2x256xf32> to vector<1x256xf32>
    %32 = vector.broadcast %31 : vector<1x256xf32> to vector<96x256xf32>
    %33 = arith.mulf %30, %32 : vector<96x256xf32>
    %34 = arith.addf %14, %33 : vector<96x256xf32>
    %cst_21 = arith.constant 0.000000e+00 : f32
    %35 = vector.broadcast %cst_21 : f32 to vector<96x256xf32>
    %c0_22 = arith.constant 0 : index
    %c2 = arith.constant 2 : index
    %36 = vector.load %arg9[%c0_22, %c2] : memref<96x324xf32, #tpu.memory_space<vmem>>, vector<96x256xf32>
    %37 = vector.extract_strided_slice %12 {offsets = [0, 1], sizes = [96, 1], strides = [1, 1]} : vector<96x9xf32> to vector<96x1xf32>
    %38 = vector.broadcast %37 : vector<96x1xf32> to vector<96x256xf32>
    %39 = arith.mulf %38, %36 : vector<96x256xf32>
    %40 = arith.addf %35, %39 : vector<96x256xf32>
    %c0_23 = arith.constant 0 : index
    %c34_24 = arith.constant 34 : index
    %41 = vector.load %arg9[%c0_23, %c34_24] : memref<96x324xf32, #tpu.memory_space<vmem>>, vector<96x256xf32>
    %42 = vector.extract_strided_slice %12 {offsets = [0, 4], sizes = [96, 1], strides = [1, 1]} : vector<96x9xf32> to vector<96x1xf32>
    %43 = vector.broadcast %42 : vector<96x1xf32> to vector<96x256xf32>
    %44 = arith.mulf %43, %41 : vector<96x256xf32>
    %45 = arith.addf %40, %44 : vector<96x256xf32>
    %c0_25 = arith.constant 0 : index
    %c66 = arith.constant 66 : index
    %46 = vector.load %arg9[%c0_25, %c66] : memref<96x324xf32, #tpu.memory_space<vmem>>, vector<96x256xf32>
    %47 = vector.extract_strided_slice %12 {offsets = [0, 7], sizes = [96, 1], strides = [1, 1]} : vector<96x9xf32> to vector<96x1xf32>
    %48 = vector.broadcast %47 : vector<96x1xf32> to vector<96x256xf32>
    %49 = arith.mulf %48, %46 : vector<96x256xf32>
    %50 = arith.addf %45, %49 : vector<96x256xf32>
    %51 = arith.addf %34, %50 : vector<96x256xf32>
    %cst_26 = arith.constant 0.000000e+00 : f32
    %52 = vector.broadcast %cst_26 : f32 to vector<96x256xf32>
    %c0_27 = arith.constant 0 : index
    %c4 = arith.constant 4 : index
    %53 = vector.load %arg9[%c0_27, %c4] : memref<96x324xf32, #tpu.memory_space<vmem>>, vector<96x256xf32>
    %54 = vector.extract_strided_slice %12 {offsets = [0, 2], sizes = [96, 1], strides = [1, 1]} : vector<96x9xf32> to vector<96x1xf32>
    %55 = vector.broadcast %54 : vector<96x1xf32> to vector<96x256xf32>
    %56 = arith.mulf %55, %53 : vector<96x256xf32>
    %57 = arith.addf %52, %56 : vector<96x256xf32>
    %c0_28 = arith.constant 0 : index
    %c36 = arith.constant 36 : index
    %58 = vector.load %arg9[%c0_28, %c36] : memref<96x324xf32, #tpu.memory_space<vmem>>, vector<96x256xf32>
    %59 = vector.extract_strided_slice %12 {offsets = [0, 5], sizes = [96, 1], strides = [1, 1]} : vector<96x9xf32> to vector<96x1xf32>
    %60 = vector.broadcast %59 : vector<96x1xf32> to vector<96x256xf32>
    %61 = arith.mulf %60, %58 : vector<96x256xf32>
    %62 = arith.addf %57, %61 : vector<96x256xf32>
    %c0_29 = arith.constant 0 : index
    %c68 = arith.constant 68 : index
    %63 = vector.load %arg9[%c0_29, %c68] : memref<96x324xf32, #tpu.memory_space<vmem>>, vector<96x256xf32>
    %64 = vector.extract_strided_slice %12 {offsets = [0, 8], sizes = [96, 1], strides = [1, 1]} : vector<96x9xf32> to vector<96x1xf32>
    %65 = vector.broadcast %64 : vector<96x1xf32> to vector<96x256xf32>
    %66 = arith.mulf %65, %63 : vector<96x256xf32>
    %67 = arith.addf %62, %66 : vector<96x256xf32>
    %68 = vector.extract_strided_slice %13 {offsets = [1, 0], sizes = [1, 256], strides = [1, 1]} : vector<2x256xf32> to vector<1x256xf32>
    %69 = vector.broadcast %68 : vector<1x256xf32> to vector<96x256xf32>
    %70 = arith.mulf %67, %69 : vector<96x256xf32>
    %71 = arith.addf %51, %70 : vector<96x256xf32>
    %c0_30 = arith.constant 0 : index
    %c0_31 = arith.constant 0 : index
    %72 = vector.load %arg7[%c0_30, %c0_31] : memref<96x1xf32, #tpu.memory_space<vmem>>, vector<96x1xf32>
    %73 = vector.broadcast %72 : vector<96x1xf32> to vector<96x256xf32>
    %74 = arith.addf %71, %73 : vector<96x256xf32>
    %75 = arith.truncf %74 : vector<96x256xf32> to vector<96x256xbf16>
    %c0_32 = arith.constant 0 : index
    %c0_33 = arith.constant 0 : index
    %c0_34 = arith.constant 0 : index
    %76 = vector.load %arg8[%c0_32, %c0_33, %c0_34] : memref<1x96x256xbf16, #tpu.memory_space<vmem>>, vector<1x96x256xbf16>
    %77 = vector.shape_cast %76 : vector<1x96x256xbf16> to vector<96x256xbf16>
    %78 = vector.shape_cast %75 : vector<96x256xbf16> to vector<1x96x256xbf16>
    tpu.vector_store %arg8[%c0_32, %c0_33, %c0_34], %78 {strides = array<i32>} : memref<1x96x256xbf16, #tpu.memory_space<vmem>>, vector<1x96x256xbf16>,
    return
  }
  func.func @transform_0(%arg0: i32, %arg1: i32) -> (i32, i32, i32) {
    %c0_i32 = arith.constant 0 : i32
    %c0_i32_0 = arith.constant 0 : i32
    %c0_i32_1 = arith.constant 0 : i32
    return %arg0, %c0_i32, %c0_i32_0 : i32, i32, i32
  }
  func.func @transform_1(%arg0: i32, %arg1: i32) -> (i32, i32) {
    %c0_i32 = arith.constant 0 : i32
    %c0_i32_0 = arith.constant 0 : i32
    %c0_i32_1 = arith.constant 0 : i32
    return %c0_i32, %c0_i32_0 : i32, i32
  }
  func.func @transform_2(%arg0: i32, %arg1: i32) -> (i32, i32) {
    %c0_i32 = arith.constant 0 : i32
    %c0_i32_0 = arith.constant 0 : i32
    return %arg1, %c0_i32 : i32, i32
  }
  func.func @transform_3(%arg0: i32, %arg1: i32) -> (i32, i32) {
    %c0_i32 = arith.constant 0 : i32
    %c0_i32_0 = arith.constant 0 : i32
    return %arg1, %c0_i32 : i32, i32
  }
  func.func @transform_4(%arg0: i32, %arg1: i32) -> (i32, i32) {
    %c0_i32 = arith.constant 0 : i32
    %c0_i32_0 = arith.constant 0 : i32
    return %arg1, %c0_i32 : i32, i32
  }
  func.func @transform_5(%arg0: i32, %arg1: i32) -> (i32, i32) {
    %c0_i32 = arith.constant 0 : i32
    %c0_i32_0 = arith.constant 0 : i32
    return %arg1, %c0_i32 : i32, i32
  }
  func.func @transform_6(%arg0: i32, %arg1: i32) -> (i32, i32, i32) {
    %c0_i32 = arith.constant 0 : i32
    %c0_i32_0 = arith.constant 0 : i32
    return %arg0, %arg1, %c0_i32 : i32, i32, i32
  }
}

</mosaic_0001>

<llo_original>
// kernel: tpu_custom_call.1
$region0: #{tpu_custom_call.1}
  #allocation0 [shape = 'u32[]', space=smem, size = 0x4, offset = 0x4, fixed_abs, tag = 'smem constant byte address 0x4 - core index']
  #allocation1 [shape = 'u32[144,128]{1,0:T(1,128)}', space=vmem, size = 0x12000, scoped, tag = 'internal scratch']
  #allocation2 [shape = 'f32[96,324]{1,0:T(8,128)}', space=vmem, size = 0x24000, scoped, tag = 'scratch operand']
  %s0 = inlined_call_operand.vmem [shape: f32[2,32,256], index: 0, kind: input, shape index: {}]
  %s1 = inlined_call_operand.vmem [shape: f32[2,256], index: 1, kind: input, shape index: {}]
  %s2 = inlined_call_operand.vmem [shape: bf16[96,32], index: 2, kind: input, shape index: {}]
  %s3 = inlined_call_operand.vmem [shape: f32[96,1], index: 3, kind: input, shape index: {}]
  %s4 = inlined_call_operand.vmem [shape: f32[96,9], index: 4, kind: input, shape index: {}]
  %s5 = inlined_call_operand.vmem [shape: f32[96,1], index: 5, kind: input, shape index: {}]
  %s6 = inlined_call_operand.hbm [shape: bf16[2,96,256], index: 6, kind: output, shape index: {}]
  %s7 = sld [smem:[#allocation0]]
  $region57: #{tpu_custom_call.1} parent=0
    _
  %s9 = ssub.s32 1, %s7
  %s10 = scalar_select 0, %s9, %s7
  $region1: #{tpu_custom_call.1} parent=0
    #allocation3 [shape = 'u8[98304]{0}', space=vmem, size = 0x18000, scoped, tag = 'output window, operand 0']
    #allocation4 [shape = 's32[2]{0}', space=sflag, size = 0x8, scoped, tag = 'scoped memory for tpu_custom_call.1']
    %11 = vsyncpa [#allocation4], 0
    %s12 = scalar_lea.sflag [#allocation4], 1
    %13 = vsyncpa %s12, 0
    loop: start=0, step=1, limit=4
    $region2: #{tpu_custom_call.1} parent=1 // loop_pre_header
      _
    $region3: #{tpu_custom_call.1} parent=1 // loop_header
      %s15 = sphi 0, %s19
      %p16 = scmp.ge.s32.totalorder %s15, 4
      %s22 = sphi 0, %s34
      %s23 = sphi 0, %s30
      %s24 = sphi 0, %s22
      %s25 = sphi 0, %s23
      %s26 = sphi 0, %s24
      %s27 = sphi 0, %s25
      %s37 = sphi 0, %s39
      %s40 = sphi 0, %s37
      %s41 = sphi 0, %s40
      %s57 = sphi 0, %s41
      %s61 = sphi 0, %s61
      %s63 = sphi 0, %s61
      %s64 = sphi 0, %s63
      %s78 = sphi 0, %s64
      %s84 = sphi 0, %s86
      %s87 = sphi 0, %s84
      %s88 = sphi 0, %s87
      %s104 = sphi 0, %s88
      %s110 = sphi 0, %s112
      %s113 = sphi 0, %s110
      %s114 = sphi 0, %s113
      %s130 = sphi 0, %s114
      %s136 = sphi 0, %s138
      %s139 = sphi 0, %s136
      %s140 = sphi 0, %s139
      %s156 = sphi 0, %s140
      %s162 = sphi 0, %s164
      %s165 = sphi 0, %s162
      %s166 = sphi 0, %s165
      %s182 = sphi 0, %s166
      %s190 = sphi 0, %s192
      %s193 = sphi 0, %s190
      %s194 = sphi 0, %s193
      %s210 = sphi 0, %s194
    $region4: #{tpu_custom_call.1} parent=1 // loop_header_branch
      %18 = sbr.rel (%p16) target = $region8
    $region5: #{tpu_custom_call.1} parent=1 // loop_body
      %s20 = ssub.s32 %s15, 1
      %s21 = ssub.s32 %s15, 2
      %s28 = sadd.s32 1, %s23
      %p29 = scmp.ge.s32.totalorder %s28, 1
      %s30 = scalar_select %p29, 0, %s28
      %s31 = sadd.s32 1, %s22
      %s32 = scalar_select %p29, %s31, %s22
      %p33 = scmp.ge.s32.totalorder %s32, 2
      %s34 = scalar_select %p33, 0, %s32
      %s35 = ssub.s32 %s22, %s34
      %p36 = scmp.eq.s32.totalorder %s35, 0
      %s38 = sadd.s32 %s37, 1
      %s39 = scalar_select %p36, %s37, %s38
      %p42 = pneg %p36
      %p43 = scmp.eq.s32.totalorder %s15, 1
      %p44 = por %p42, %p43
      %p45 = scmp.ne.s32.totalorder %s37, %s40
      %p46 = scmp.eq.s32.totalorder %s15, 0
      %p47 = por %p45, %p46
      %p48 = scmp.ne.s32.totalorder %s37, %s40
      %p49 = scmp.eq.s32.totalorder %s20, 1
      %p50 = por %p48, %p49
      %p51 = scmp.ne.s32.totalorder %s40, %s41
      %p52 = scmp.eq.s32.totalorder %s20, 0
      %p53 = por %p51, %p52
      %p54 = scmp.ne.s32.totalorder %s40, %s41
      %p55 = scmp.eq.s32.totalorder %s21, 1
      %p56 = por %p54, %p55
      %p58 = scmp.ne.s32.totalorder %s41, %s57
      %p59 = scmp.eq.s32.totalorder %s21, 0
      %p60 = por %p58, %p59
      %s62 = sadd.s32 %s61, 1
      %p65 = scmp.eq.s32.totalorder %s15, 1
      %p66 = scmp.ne.s32.totalorder %s61, %s63
      %p67 = scmp.eq.s32.totalorder %s15, 0
      %p68 = por %p66, %p67
      %p69 = scmp.ne.s32.totalorder %s61, %s63
      %p70 = scmp.eq.s32.totalorder %s20, 1
      %p71 = por %p69, %p70
      %p72 = scmp.ne.s32.totalorder %s63, %s64
      %p73 = scmp.eq.s32.totalorder %s20, 0
      %p74 = por %p72, %p73
      %p75 = scmp.ne.s32.totalorder %s63, %s64
      %p76 = scmp.eq.s32.totalorder %s21, 1
      %p77 = por %p75, %p76
      %p79 = scmp.ne.s32.totalorder %s64, %s78
      %p80 = scmp.eq.s32.totalorder %s21, 0
      %p81 = por %p79, %p80
      %s82 = ssub.s32 %s23, %s30
      %p83 = scmp.eq.s32.totalorder %s82, 0
      %s85 = sadd.s32 %s84, 1
      %s86 = scalar_select %p83, %s84, %s85
      %p89 = pneg %p83
      %p90 = scmp.eq.s32.totalorder %s15, 1
      %p91 = por %p89, %p90
      %p92 = scmp.ne.s32.totalorder %s84, %s87
      %p93 = scmp.eq.s32.totalorder %s15, 0
      %p94 = por %p92, %p93
      %p95 = scmp.ne.s32.totalorder %s84, %s87
      %p96 = scmp.eq.s32.totalorder %s20, 1
      %p97 = por %p95, %p96
      %p98 = scmp.ne.s32.totalorder %s87, %s88
      %p99 = scmp.eq.s32.totalorder %s20, 0
      %p100 = por %p98, %p99
      %p101 = scmp.ne.s32.totalorder %s87, %s88
      %p102 = scmp.eq.s32.totalorder %s21, 1
      %p103 = por %p101, %p102
      %p105 = scmp.ne.s32.totalorder %s88, %s104
      %p106 = scmp.eq.s32.totalorder %s21, 0
      %p107 = por %p105, %p106
      %s108 = ssub.s32 %s23, %s30
      %p109 = scmp.eq.s32.totalorder %s108, 0
      %s111 = sadd.s32 %s110, 1
      %s112 = scalar_select %p109, %s110, %s111
      %p115 = pneg %p109
      %p116 = scmp.eq.s32.totalorder %s15, 1
      %p117 = por %p115, %p116
      %p118 = scmp.ne.s32.totalorder %s110, %s113
      %p119 = scmp.eq.s32.totalorder %s15, 0
      %p120 = por %p118, %p119
      %p121 = scmp.ne.s32.totalorder %s110, %s113
      %p122 = scmp.eq.s32.totalorder %s20, 1
      %p123 = por %p121, %p122
      %p124 = scmp.ne.s32.totalorder %s113, %s114
      %p125 = scmp.eq.s32.totalorder %s20, 0
      %p126 = por %p124, %p125
      %p127 = scmp.ne.s32.totalorder %s113, %s114
      %p128 = scmp.eq.s32.totalorder %s21, 1
      %p129 = por %p127, %p128
      %p131 = scmp.ne.s32.totalorder %s114, %s130
      %p132 = scmp.eq.s32.totalorder %s21, 0
      %p133 = por %p131, %p132
      %s134 = ssub.s32 %s23, %s30
      %p135 = scmp.eq.s32.totalorder %s134, 0
      %s137 = sadd.s32 %s136, 1
      %s138 = scalar_select %p135, %s136, %s137
      %p141 = pneg %p135
      %p142 = scmp.eq.s32.totalorder %s15, 1
      %p143 = por %p141, %p142
      %p144 = scmp.ne.s32.totalorder %s136, %s139
      %p145 = scmp.eq.s32.totalorder %s15, 0
      %p146 = por %p144, %p145
      %p147 = scmp.ne.s32.totalorder %s136, %s139
      %p148 = scmp.eq.s32.totalorder %s20, 1
      %p149 = por %p147, %p148
      %p150 = scmp.ne.s32.totalorder %s139, %s140
      %p151 = scmp.eq.s32.totalorder %s20, 0
      %p152 = por %p150, %p151
      %p153 = scmp.ne.s32.totalorder %s139, %s140
      %p154 = scmp.eq.s32.totalorder %s21, 1
      %p155 = por %p153, %p154
      %p157 = scmp.ne.s32.totalorder %s140, %s156
      %p158 = scmp.eq.s32.totalorder %s21, 0
      %p159 = por %p157, %p158
      %s160 = ssub.s32 %s23, %s30
      %p161 = scmp.eq.s32.totalorder %s160, 0
      %s163 = sadd.s32 %s162, 1
      %s164 = scalar_select %p161, %s162, %s163
      %p167 = pneg %p161
      %p168 = scmp.eq.s32.totalorder %s15, 1
      %p169 = por %p167, %p168
      %p170 = scmp.ne.s32.totalorder %s162, %s165
      %p171 = scmp.eq.s32.totalorder %s15, 0
      %p172 = por %p170, %p171
      %p173 = scmp.ne.s32.totalorder %s162, %s165
      %p174 = scmp.eq.s32.totalorder %s20, 1
      %p175 = por %p173, %p174
      %p176 = scmp.ne.s32.totalorder %s165, %s166
      %p177 = scmp.eq.s32.totalorder %s20, 0
      %p178 = por %p176, %p177
      %p179 = scmp.ne.s32.totalorder %s165, %s166
      %p180 = scmp.eq.s32.totalorder %s21, 1
      %p181 = por %p179, %p180
      %p183 = scmp.ne.s32.totalorder %s166, %s182
      %p184 = scmp.eq.s32.totalorder %s21, 0
      %p185 = por %p183, %p184
      %s186 = ssub.s32 %s22, %s34
      %s187 = ssub.s32 %s23, %s30
      %s188 = sor.u32 %s186, %s187
      %p189 = scmp.eq.s32.totalorder %s188, 0
      %s191 = sadd.s32 %s190, 1
      %s192 = scalar_select %p189, %s190, %s191
      %p195 = pneg %p189
      %p196 = scmp.eq.s32.totalorder %s15, 1
      %p197 = por %p195, %p196
      %p198 = scmp.ne.s32.totalorder %s190, %s193
      %p199 = scmp.eq.s32.totalorder %s15, 0
      %p200 = por %p198, %p199
      %p201 = scmp.ne.s32.totalorder %s190, %s193
      %p202 = scmp.eq.s32.totalorder %s20, 1
      %p203 = por %p201, %p202
      %p204 = scmp.ne.s32.totalorder %s193, %s194
      %p205 = scmp.eq.s32.totalorder %s20, 0
      %p206 = por %p204, %p205
      %p207 = scmp.ne.s32.totalorder %s193, %s194
      %p208 = scmp.eq.s32.totalorder %s21, 1
      %p209 = por %p207, %p208
      %p211 = scmp.ne.s32.totalorder %s194, %s210
      %p212 = scmp.eq.s32.totalorder %s21, 0
      %p213 = por %p211, %p212
      %p214 = scmp.le.s32.totalorder 1, %s15
      %p215 = scmp.lt.s32.totalorder %s15, 3
      %p216 = pnand %p214, %p215
      %p217 = pneg %p216
      // Predicated region
      $region9: #{tpu_custom_call.1} parent=5 // pred_check
        _
      $region10: #{tpu_custom_call.1} parent=5 // pred_check_branch
        %219 = sbr.rel (%p216) target = $region12
      $region11: #{tpu_custom_call.1} parent=5 // pred_region
        %s220 = ssub.s32 %s15, 1
        // Predicated region
        $region13: #{tpu_custom_call.1} parent=11 // pred_check
          %p221 = pneg %p74
        $region14: #{tpu_custom_call.1} parent=11 // pred_check_branch
          %223 = sbr.rel (%p221) target = $region16
        $region15: #{tpu_custom_call.1} parent=11 // pred_region
          _
        $region16: #{tpu_custom_call.1} parent=11 // pred_fallthru
          _
        // Predicated region
        $region17: #{tpu_custom_call.1} parent=11 // pred_check
          %p224 = pneg %p100
        $region18: #{tpu_custom_call.1} parent=11 // pred_check_branch
          %226 = sbr.rel (%p224) target = $region20
        $region19: #{tpu_custom_call.1} parent=11 // pred_region
          %s227 = smul.u32 12, %s25
          %p228 = scmp.lt.s32.totalorder %s227, 11
          %s229 = scalar_select %p228, %s227, 11
          %s230 = smul.addr %s229, 4
          %s231 = scalar_lea.vmem %s2, %s230
          %s232 = smul.u32 12, %s25
        $region20: #{tpu_custom_call.1} parent=11 // pred_fallthru
          _
        // Predicated region
        $region21: #{tpu_custom_call.1} parent=11 // pred_check
          %p233 = pneg %p126
        $region22: #{tpu_custom_call.1} parent=11 // pred_check_branch
          %235 = sbr.rel (%p233) target = $region24
        $region23: #{tpu_custom_call.1} parent=11 // pred_region
          %s236 = smul.u32 12, %s25
          %p237 = scmp.lt.s32.totalorder %s236, 11
          %s238 = scalar_select %p237, %s236, 11
          %s239 = smul.addr %s238, 8
          %s240 = scalar_lea.vmem %s3, %s239
          %s241 = smul.u32 12, %s25
        $region24: #{tpu_custom_call.1} parent=11 // pred_fallthru
          _
        // Predicated region
        $region25: #{tpu_custom_call.1} parent=11 // pred_check
          %p242 = pneg %p152
        $region26: #{tpu_custom_call.1} parent=11 // pred_check_branch
          %244 = sbr.rel (%p242) target = $region28
        $region27: #{tpu_custom_call.1} parent=11 // pred_region
          %s245 = smul.u32 12, %s25
          %p246 = scmp.lt.s32.totalorder %s245, 11
          %s247 = scalar_select %p246, %s245, 11
          %s248 = smul.addr %s247, 8
          %s249 = scalar_lea.vmem %s4, %s248
          %s250 = smul.u32 12, %s25
        $region28: #{tpu_custom_call.1} parent=11 // pred_fallthru
          _
        // Predicated region
        $region29: #{tpu_custom_call.1} parent=11 // pred_check
          %p251 = pneg %p178
        $region30: #{tpu_custom_call.1} parent=11 // pred_check_branch
          %253 = sbr.rel (%p251) target = $region32
        $region31: #{tpu_custom_call.1} parent=11 // pred_region
          %s254 = smul.u32 12, %s25
          %p255 = scmp.lt.s32.totalorder %s254, 11
          %s256 = scalar_select %p255, %s254, 11
          %s257 = smul.addr %s256, 8
          %s258 = scalar_lea.vmem %s5, %s257
          %s259 = smul.u32 12, %s25
        $region32: #{tpu_custom_call.1} parent=11 // pred_fallthru
          _
      $region12: #{tpu_custom_call.1} parent=5 // pred_fallthru
        _
      %p260 = scmp.lt.s32.totalorder %s15, 2
      // Predicated region
      $region33: #{tpu_custom_call.1} parent=5 // pred_check
        %p261 = pneg %p260
      $region34: #{tpu_custom_call.1} parent=5 // pred_check_branch
        %263 = sbr.rel (%p261) target = $region36
      $region35: #{tpu_custom_call.1} parent=5 // pred_region
        // Predicated region
        $region37: #{tpu_custom_call.1} parent=35 // pred_check
          %p264 = pneg %p47
        $region38: #{tpu_custom_call.1} parent=35 // pred_check_branch
          %266 = sbr.rel (%p264) target = $region40
        $region39: #{tpu_custom_call.1} parent=35 // pred_region
          %p267 = scmp.lt.s32.totalorder %s22, 1
          %s268 = scalar_select %p267, %s22, 1
          %s269 = smul.addr %s268, 8
          %s270 = smul.addr %s269, 8
          %s271 = scalar_lea.vmem %s0, %s270
        $region40: #{tpu_custom_call.1} parent=35 // pred_fallthru
          _
      $region36: #{tpu_custom_call.1} parent=5 // pred_fallthru
        _
      %p272 = scmp.le.s32.totalorder 1, %s15
      %p273 = scmp.lt.s32.totalorder %s15, 3
      %p274 = pnand %p272, %p273
      %p275 = pneg %p274
      // Predicated region
      $region41: #{tpu_custom_call.1} parent=5 // pred_check
        _
      $region42: #{tpu_custom_call.1} parent=5 // pred_check_branch
        %277 = sbr.rel (%p274) target = $region44
      $region43: #{tpu_custom_call.1} parent=5 // pred_region
        %s278 = ssub.s32 %s15, 1
        %p279 = scmp.lt.s32.totalorder %s24, 1
        %s280 = scalar_select %p279, %s24, 1
        %s281 = smul.addr %s280, 8
        %s282 = smul.addr %s281, 8
        %s283 = scalar_lea.vmem %s0, %s282
        %p284 = pneg %p53
        %p285 = pneg %p50
        %p286 = pneg %p74
        %p287 = pneg %p71
        %s288 = smul.u32 12, %s25
        %p289 = scmp.lt.s32.totalorder %s288, 11
        %s290 = scalar_select %p289, %s288, 11
        %s291 = smul.addr %s290, 4
        %s292 = scalar_lea.vmem %s2, %s291
        %p293 = pneg %p100
        %p294 = pneg %p97
        %s295 = smul.u32 12, %s25
        %p296 = scmp.lt.s32.totalorder %s295, 11
        %s297 = scalar_select %p296, %s295, 11
        %s298 = smul.addr %s297, 8
        %s299 = scalar_lea.vmem %s3, %s298
        %p300 = pneg %p126
        %p301 = pneg %p123
        %s302 = smul.u32 12, %s25
        %p303 = scmp.lt.s32.totalorder %s302, 11
        %s304 = scalar_select %p303, %s302, 11
        %s305 = smul.addr %s304, 8
        %s306 = scalar_lea.vmem %s4, %s305
        %p307 = pneg %p152
        %p308 = pneg %p149
        %s309 = smul.u32 12, %s25
        %p310 = scmp.lt.s32.totalorder %s309, 11
        %s311 = scalar_select %p310, %s309, 11
        %s312 = smul.addr %s311, 8
        %s313 = scalar_lea.vmem %s5, %s312
        %p314 = pneg %p178
        %p315 = pneg %p175
        %p316 = pneg %p206
        %p317 = pneg %p203
        %s318 = sand.u32 %s193, 1
        %s319 = scalar_lea.sflag [#allocation4], %s318
        %s320 = sand.u32 %s193, 1
        %s321 = smul.addr %s320, 96
        %s322 = scalar_lea.vmem [#allocation3], %s321
        %p323 = scmp.lt.s32.totalorder %s24, 1
        %s324 = scalar_select %p323, %s24, 1
        %s325 = smul.addr %s324, 8
        %s326 = smul.addr %s325, 8
        %s327 = scalar_lea.vmem %s0, %s326
        %s328 = smul.u32 12, %s25
        %p329 = scmp.lt.s32.totalorder %s328, 11
        %s330 = scalar_select %p329, %s328, 11
        %s331 = smul.addr %s330, 4
        %s332 = scalar_lea.vmem %s2, %s331
        %s333 = smul.u32 12, %s25
        %s334 = smul.u32 12, %s25
        %p335 = scmp.lt.s32.totalorder %s334, 11
        %s336 = scalar_select %p335, %s334, 11
        %s337 = smul.addr %s336, 8
        %s338 = scalar_lea.vmem %s3, %s337
        %s339 = smul.u32 12, %s25
        %s340 = smul.u32 12, %s25
        %p341 = scmp.lt.s32.totalorder %s340, 11
        %s342 = scalar_select %p341, %s340, 11
        %s343 = smul.addr %s342, 8
        %s344 = scalar_lea.vmem %s4, %s343
        %s345 = smul.u32 12, %s25
        %s346 = smul.u32 12, %s25
        %p347 = scmp.lt.s32.totalorder %s346, 11
        %s348 = scalar_select %p347, %s346, 11
        %s349 = smul.addr %s348, 8
        %s350 = scalar_lea.vmem %s5, %s349
        %s351 = smul.u32 12, %s25
        %s352 = smul.u32 12, %s25
        %v354 = vld [vmem:[%s327] sm:$0xff]
        %v355 = vld [vmem:[%s327 + $0x8] sm:$0xff]
        %v356 = vld [vmem:[%s327 + $0x10] sm:$0xff]
        %v357 = vld [vmem:[%s327 + $0x18] sm:$0xff]
        %v358 = vld [vmem:[%s327 + $0x20] sm:$0xff]
        %v359 = vld [vmem:[%s327 + $0x28] sm:$0xff]
        %v360 = vld [vmem:[%s327 + $0x30] sm:$0xff]
        %v361 = vld [vmem:[%s327 + $0x38] sm:$0xff]
        %v362 = vpack.c.bf16 %v356, %v354
        %v363 = vpack.c.bf16 %v357, %v355
        %v364 = vpack.c.bf16 %v360, %v358
        %v365 = vpack.c.bf16 %v361, %v359
        %v366 = vld [vmem:[%s332] sm:$0xf]
        %v367 = vld [vmem:[%s332 + $0x4] sm:$0xf]
        %v368 = vld [vmem:[%s332 + $0x8] sm:$0xf]
        %v369 = vld [vmem:[%s332 + $0xc] sm:$0xf]
        %v370 = vld [vmem:[%s332 + $0x10] sm:$0xf]
        %v371 = vld [vmem:[%s332 + $0x14] sm:$0xf]
        %v372 = vld [vmem:[%s332 + $0x18] sm:$0xf]
        %v373 = vld [vmem:[%s332 + $0x1c] sm:$0xf]
        %v374 = vld [vmem:[%s332 + $0x20] sm:$0xf]
        %v375 = vld [vmem:[%s332 + $0x24] sm:$0xf]
        %v376 = vld [vmem:[%s332 + $0x28] sm:$0xf]
        %v377 = vld [vmem:[%s332 + $0x2c] sm:$0xf]
        %v378 = vld [vmem:[%s338] sm:$0xff]
        %v379 = vld [vmem:[%s338 + $0x8] sm:$0xff]
        %v380 = vld [vmem:[%s338 + $0x10] sm:$0xff]
        %v381 = vld [vmem:[%s338 + $0x18] sm:$0xff]
        %v382 = vld [vmem:[%s338 + $0x20] sm:$0xff]
        %v383 = vld [vmem:[%s338 + $0x28] sm:$0xff]
        %v384 = vld [vmem:[%s338 + $0x30] sm:$0xff]
        %v385 = vld [vmem:[%s338 + $0x38] sm:$0xff]
        %v386 = vld [vmem:[%s338 + $0x40] sm:$0xff]
        %v387 = vld [vmem:[%s338 + $0x48] sm:$0xff]
        %v388 = vld [vmem:[%s338 + $0x50] sm:$0xff]
        %v389 = vld [vmem:[%s338 + $0x58] sm:$0xff]
        %391 = vset.pattern.permute.xlu0 0
        %392 = vperm.xlu0 %391, %v378
        %v393 = vpop.permute.xlu0 %392
        %396 = vset.pattern.permute.xlu0 0
        %397 = vperm.xlu0 %396, %v379
        %v398 = vpop.permute.xlu0 %397
        %401 = vset.pattern.permute.xlu0 0
        %402 = vperm.xlu0 %401, %v380
        %v403 = vpop.permute.xlu0 %402
        %406 = vset.pattern.permute.xlu0 0
        %407 = vperm.xlu0 %406, %v381
        %v408 = vpop.permute.xlu0 %407
        %411 = vset.pattern.permute.xlu0 0
        %412 = vperm.xlu0 %411, %v382
        %v413 = vpop.permute.xlu0 %412
        %416 = vset.pattern.permute.xlu0 0
        %417 = vperm.xlu0 %416, %v383
        %v418 = vpop.permute.xlu0 %417
        %421 = vset.pattern.permute.xlu0 0
        %422 = vperm.xlu0 %421, %v384
        %v423 = vpop.permute.xlu0 %422
        %426 = vset.pattern.permute.xlu0 0
        %427 = vperm.xlu0 %426, %v385
        %v428 = vpop.permute.xlu0 %427
        %431 = vset.pattern.permute.xlu0 0
        %432 = vperm.xlu0 %431, %v386
        %v433 = vpop.permute.xlu0 %432
        %436 = vset.pattern.permute.xlu0 0
        %437 = vperm.xlu0 %436, %v387
        %v438 = vpop.permute.xlu0 %437
        %441 = vset.pattern.permute.xlu0 0
        %442 = vperm.xlu0 %441, %v388
        %v443 = vpop.permute.xlu0 %442
        %446 = vset.pattern.permute.xlu0 0
        %447 = vperm.xlu0 %446, %v389
        %v448 = vpop.permute.xlu0 %447
        %v462 = vunpack.c.l.b16 %v366
        %v463 = vunpack.c.l.b16 %v367
        %v464 = vunpack.c.l.b16 %v368
        %v465 = vunpack.c.l.b16 %v369
        %v466 = vunpack.c.l.b16 %v370
        %v467 = vunpack.c.l.b16 %v371
        %v468 = vunpack.c.l.b16 %v372
        %v469 = vunpack.c.l.b16 %v373
        %v470 = vunpack.c.l.b16 %v374
        %v471 = vunpack.c.l.b16 %v375
        %v472 = vunpack.c.l.b16 %v376
        %v473 = vunpack.c.l.b16 %v377
        %v474 = vpack.c.b16 %v463, %v462
        %v475 = vpack.c.b16 %v465, %v464
        %v476 = vpack.c.b16 %v467, %v466
        %v477 = vpack.c.b16 %v469, %v468
        %v478 = vpack.c.b16 %v471, %v470
        %v479 = vpack.c.b16 %v473, %v472
        %vm480 = vcmask 261120
        %v482 = vsel %vm480, %v474, 0
        %v485 = vsel %vm480, %v475, 0
        %v488 = vsel %vm480, %v476, 0
        %v491 = vsel %vm480, %v477, 0
        %v494 = vsel %vm480, %v478, 0
        %v497 = vsel %vm480, %v479, 0
        %499 = vmatprep.subr.bf16.mxu0 0
        %500 = vmatpush1.bf16.msra.mxu0 0
        %501 = vmatprep.subr.bf16.mxu0 0
        %502 = vmatpush1.bf16.msra.mxu0 0
        %503 = vmatprep.subr.bf16.mxu0 0
        %504 = vmatpush1.bf16.msra.mxu0 0
        %505 = vmatprep.subr.bf16.mxu0 0
        %506 = vmatpush1.bf16.msra.mxu0 0
        %507 = vmatprep.subr.bf16.mxu0 0
        %508 = vmatpush1.bf16.msra.mxu0 0
        %509 = vmatprep.subr.bf16.mxu0 0
        %510 = vmatpush1.bf16.msra.mxu0 0
        %511 = vmatprep.subr.bf16.mxu0 %v365
        %512 = vmatpush1.bf16.msra.mxu0 %v364
        %513 = vmatprep.subr.bf16.mxu0 %v363
        %514 = vmatpush1.bf16.msra.mxu0 %v362
        %515 = vmatprep.subr.bf16.mxu0 0
        %516 = vmatpush2.bf16.msra.mxu0 0
        %517 = vmatprep.subr.bf16.mxu0 0
        %518 = vmatpush2.bf16.msra.mxu0 0
        %519 = vmatprep.subr.bf16.mxu0 0
        %520 = vmatpush2.bf16.msra.mxu0 0
        %521 = vmatprep.subr.bf16.mxu0 0
        %522 = vmatpush2.bf16.msra.mxu0 0
        %523 = vmatprep.subr.bf16.mxu0 0
        %524 = vmatpush2.bf16.msra.mxu0 0
        %525 = vmatprep.subr.bf16.mxu0 0
        %526 = vmatpush2.bf16.msra.mxu0 0
        %527 = vmatprep.subr.bf16.mxu0 0
        %528 = vmatpush2.bf16.msra.mxu0 0
        %529 = vmatprep.subr.bf16.mxu0 0
        %530 = vmatpush2.bf16.msra.mxu0 0
        %531 = vmatprep.mubr.bf16.mxu0 0
        %532 = vmatmul.mubr.bf16.gmra.mxu0 %v482
        %v533 = vpop.f32.mrf.mxu0
        %v534 = vadd.f32 %v393, %v533
        %v535 = vpop.f32.mrf.mxu0
        %v536 = vadd.f32 %v393, %v535
        %v537 = vpop.f32.mrf.mxu0
        %v538 = vadd.f32 %v398, %v537
        %v539 = vpop.f32.mrf.mxu0
        %v540 = vadd.f32 %v398, %v539
        %541 = vmatprep.mubr.bf16.mxu0 0
        %542 = vmatmul.mubr.bf16.gmra.mxu0 %v485
        %v543 = vpop.f32.mrf.mxu0
        %v544 = vadd.f32 %v403, %v543
        %v545 = vpop.f32.mrf.mxu0
        %v546 = vadd.f32 %v403, %v545
        %v547 = vpop.f32.mrf.mxu0
        %v548 = vadd.f32 %v408, %v547
        %v549 = vpop.f32.mrf.mxu0
        %v550 = vadd.f32 %v408, %v549
        %551 = vmatprep.mubr.bf16.mxu0 0
        %552 = vmatmul.mubr.bf16.gmra.mxu0 %v488
        %v553 = vpop.f32.mrf.mxu0
        %v554 = vadd.f32 %v413, %v553
        %v555 = vpop.f32.mrf.mxu0
        %v556 = vadd.f32 %v413, %v555
        %v557 = vpop.f32.mrf.mxu0
        %v558 = vadd.f32 %v418, %v557
        %v559 = vpop.f32.mrf.mxu0
        %v560 = vadd.f32 %v418, %v559
        %561 = vmatprep.mubr.bf16.mxu0 0
        %562 = vmatmul.mubr.bf16.gmra.mxu0 %v491
        %v563 = vpop.f32.mrf.mxu0
        %v564 = vadd.f32 %v423, %v563
        %v565 = vpop.f32.mrf.mxu0
        %v566 = vadd.f32 %v423, %v565
        %v567 = vpop.f32.mrf.mxu0
        %v568 = vadd.f32 %v428, %v567
        %v569 = vpop.f32.mrf.mxu0
        %v570 = vadd.f32 %v428, %v569
        %571 = vmatprep.mubr.bf16.mxu0 0
        %572 = vmatmul.mubr.bf16.gmra.mxu0 %v494
        %v573 = vpop.f32.mrf.mxu0
        %v574 = vadd.f32 %v433, %v573
        %v575 = vpop.f32.mrf.mxu0
        %v576 = vadd.f32 %v433, %v575
        %v577 = vpop.f32.mrf.mxu0
        %v578 = vadd.f32 %v438, %v577
        %v579 = vpop.f32.mrf.mxu0
        %v580 = vadd.f32 %v438, %v579
        %581 = vmatprep.mubr.bf16.mxu0 0
        %582 = vmatmul.mubr.bf16.gmra.mxu0 %v497
        %v583 = vpop.f32.mrf.mxu0
        %v584 = vadd.f32 %v443, %v583
        %v585 = vpop.f32.mrf.mxu0
        %v586 = vadd.f32 %v443, %v585
        %v587 = vpop.f32.mrf.mxu0
        %v588 = vadd.f32 %v448, %v587
        %v589 = vpop.f32.mrf.mxu0
        %v590 = vadd.f32 %v448, %v589
        %591 = vdwg.mxu0
        %vm592 = vcmask 277504
        %593 = vst.msk [vmem:[#allocation2] sm:$0xff] %vm592, 0.0
        %594 = vst.msk [vmem:[#allocation2 + $0x18] sm:$0xff] %vm592, 0.0
        %595 = vst.msk [vmem:[#allocation2 + $0x30] sm:$0xff] %vm592, 0.0
        %596 = vst.msk [vmem:[#allocation2 + $0x48] sm:$0xff] %vm592, 0.0
        %597 = vst.msk [vmem:[#allocation2 + $0x60] sm:$0xff] %vm592, 0.0
        %598 = vst.msk [vmem:[#allocation2 + $0x78] sm:$0xff] %vm592, 0.0
        %599 = vst.msk [vmem:[#allocation2 + $0x90] sm:$0xff] %vm592, 0.0
        %600 = vst.msk [vmem:[#allocation2 + $0xa8] sm:$0xff] %vm592, 0.0
        %601 = vst.msk [vmem:[#allocation2 + $0xc0] sm:$0xff] %vm592, 0.0
        %602 = vst.msk [vmem:[#allocation2 + $0xd8] sm:$0xff] %vm592, 0.0
        %603 = vst.msk [vmem:[#allocation2 + $0xf0] sm:$0xff] %vm592, 0.0
        %604 = vst.msk [vmem:[#allocation2 + $0x108] sm:$0xff] %vm592, 0.0
        %vm605 = vcmask 556304
        %606 = vst.msk [vmem:[#allocation2 + $0x10] sm:$0xff] %vm605, 0.0
        %607 = vst.msk [vmem:[#allocation2 + $0x28] sm:$0xff] %vm605, 0.0
        %608 = vst.msk [vmem:[#allocation2 + $0x40] sm:$0xff] %vm605, 0.0
        %609 = vst.msk [vmem:[#allocation2 + $0x58] sm:$0xff] %vm605, 0.0
        %610 = vst.msk [vmem:[#allocation2 + $0x70] sm:$0xff] %vm605, 0.0
        %611 = vst.msk [vmem:[#allocation2 + $0x88] sm:$0xff] %vm605, 0.0
        %612 = vst.msk [vmem:[#allocation2 + $0xa0] sm:$0xff] %vm605, 0.0
        %613 = vst.msk [vmem:[#allocation2 + $0xb8] sm:$0xff] %vm605, 0.0
        %614 = vst.msk [vmem:[#allocation2 + $0xd0] sm:$0xff] %vm605, 0.0
        %615 = vst.msk [vmem:[#allocation2 + $0xe8] sm:$0xff] %vm605, 0.0
        %616 = vst.msk [vmem:[#allocation2 + $0x100] sm:$0xff] %vm605, 0.0
        %617 = vst.msk [vmem:[#allocation2 + $0x118] sm:$0xff] %vm605, 0.0
        %642 = vrot.lane.b32.xlu0 %v534, 34
        %v643 = vpop.permute.xlu0 %642
        %644 = vrot.lane.b32.xlu0 %v536, 34
        %v645 = vpop.permute.xlu0 %644
        %646 = vrot.lane.b32.xlu0 %v538, 34
        %v647 = vpop.permute.xlu0 %646
        %648 = vrot.lane.b32.xlu0 %v540, 34
        %v649 = vpop.permute.xlu0 %648
        %650 = vrot.lane.b32.xlu0 %v544, 34
        %v651 = vpop.permute.xlu0 %650
        %652 = vrot.lane.b32.xlu0 %v546, 34
        %v653 = vpop.permute.xlu0 %652
        %654 = vrot.lane.b32.xlu0 %v548, 34
        %v655 = vpop.permute.xlu0 %654
        %656 = vrot.lane.b32.xlu0 %v550, 34
        %v657 = vpop.permute.xlu0 %656
        %658 = vrot.lane.b32.xlu0 %v554, 34
        %v659 = vpop.permute.xlu0 %658
        %660 = vrot.lane.b32.xlu0 %v556, 34
        %v661 = vpop.permute.xlu0 %660
        %662 = vrot.lane.b32.xlu0 %v558, 34
        %v663 = vpop.permute.xlu0 %662
        %664 = vrot.lane.b32.xlu0 %v560, 34
        %v665 = vpop.permute.xlu0 %664
        %666 = vrot.lane.b32.xlu0 %v564, 34
        %v667 = vpop.permute.xlu0 %666
        %668 = vrot.lane.b32.xlu0 %v566, 34
        %v669 = vpop.permute.xlu0 %668
        %670 = vrot.lane.b32.xlu0 %v568, 34
        %v671 = vpop.permute.xlu0 %670
        %672 = vrot.lane.b32.xlu0 %v570, 34
        %v673 = vpop.permute.xlu0 %672
        %674 = vrot.lane.b32.xlu0 %v574, 34
        %v675 = vpop.permute.xlu0 %674
        %676 = vrot.lane.b32.xlu0 %v576, 34
        %v677 = vpop.permute.xlu0 %676
        %678 = vrot.lane.b32.xlu0 %v578, 34
        %v679 = vpop.permute.xlu0 %678
        %680 = vrot.lane.b32.xlu0 %v580, 34
        %v681 = vpop.permute.xlu0 %680
        %682 = vrot.lane.b32.xlu0 %v584, 34
        %v683 = vpop.permute.xlu0 %682
        %684 = vrot.lane.b32.xlu0 %v586, 34
        %v685 = vpop.permute.xlu0 %684
        %686 = vrot.lane.b32.xlu0 %v588, 34
        %v687 = vpop.permute.xlu0 %686
        %688 = vrot.lane.b32.xlu0 %v590, 34
        %v689 = vpop.permute.xlu0 %688
        %v690 = vsel %vm592, %v643, %v645
        %v691 = vsel %vm592, %v647, %v649
        %v692 = vsel %vm592, %v651, %v653
        %v693 = vsel %vm592, %v655, %v657
        %v694 = vsel %vm592, %v659, %v661
        %v695 = vsel %vm592, %v663, %v665
        %v696 = vsel %vm592, %v667, %v669
        %v697 = vsel %vm592, %v671, %v673
        %v698 = vsel %vm592, %v675, %v677
        %v699 = vsel %vm592, %v679, %v681
        %v700 = vsel %vm592, %v683, %v685
        %v701 = vsel %vm592, %v687, %v689
        %vm738 = vcmask 1047824
        %739 = vst.msk [vmem:[#allocation2] sm:$0xff] %vm738, %v643
        %740 = vst [vmem:[#allocation2 + $0x8] sm:$0xff] %v690
        %741 = vst.msk [vmem:[#allocation2 + $0x10] sm:$0xff] %vm592, %v645
        %742 = vst.msk [vmem:[#allocation2 + $0x18] sm:$0xff] %vm738, %v647
        %743 = vst [vmem:[#allocation2 + $0x20] sm:$0xff] %v691
        %744 = vst.msk [vmem:[#allocation2 + $0x28] sm:$0xff] %vm592, %v649
        %745 = vst.msk [vmem:[#allocation2 + $0x30] sm:$0xff] %vm738, %v651
        %746 = vst [vmem:[#allocation2 + $0x38] sm:$0xff] %v692
        %747 = vst.msk [vmem:[#allocation2 + $0x40] sm:$0xff] %vm592, %v653
        %748 = vst.msk [vmem:[#allocation2 + $0x48] sm:$0xff] %vm738, %v655
        %749 = vst [vmem:[#allocation2 + $0x50] sm:$0xff] %v693
        %750 = vst.msk [vmem:[#allocation2 + $0x58] sm:$0xff] %vm592, %v657
        %751 = vst.msk [vmem:[#allocation2 + $0x60] sm:$0xff] %vm738, %v659
        %752 = vst [vmem:[#allocation2 + $0x68] sm:$0xff] %v694
        %753 = vst.msk [vmem:[#allocation2 + $0x70] sm:$0xff] %vm592, %v661
        %754 = vst.msk [vmem:[#allocation2 + $0x78] sm:$0xff] %vm738, %v663
        %755 = vst [vmem:[#allocation2 + $0x80] sm:$0xff] %v695
        %756 = vst.msk [vmem:[#allocation2 + $0x88] sm:$0xff] %vm592, %v665
        %757 = vst.msk [vmem:[#allocation2 + $0x90] sm:$0xff] %vm738, %v667
        %758 = vst [vmem:[#allocation2 + $0x98] sm:$0xff] %v696
        %759 = vst.msk [vmem:[#allocation2 + $0xa0] sm:$0xff] %vm592, %v669
        %760 = vst.msk [vmem:[#allocation2 + $0xa8] sm:$0xff] %vm738, %v671
        %761 = vst [vmem:[#allocation2 + $0xb0] sm:$0xff] %v697
        %762 = vst.msk [vmem:[#allocation2 + $0xb8] sm:$0xff] %vm592, %v673
        %763 = vst.msk [vmem:[#allocation2 + $0xc0] sm:$0xff] %vm738, %v675
        %764 = vst [vmem:[#allocation2 + $0xc8] sm:$0xff] %v698
        %765 = vst.msk [vmem:[#allocation2 + $0xd0] sm:$0xff] %vm592, %v677
        %766 = vst.msk [vmem:[#allocation2 + $0xd8] sm:$0xff] %vm738, %v679
        %767 = vst [vmem:[#allocation2 + $0xe0] sm:$0xff] %v699
        %768 = vst.msk [vmem:[#allocation2 + $0xe8] sm:$0xff] %vm592, %v681
        %769 = vst.msk [vmem:[#allocation2 + $0xf0] sm:$0xff] %vm738, %v683
        %770 = vst [vmem:[#allocation2 + $0xf8] sm:$0xff] %v700
        %771 = vst.msk [vmem:[#allocation2 + $0x100] sm:$0xff] %vm592, %v685
        %772 = vst.msk [vmem:[#allocation2 + $0x108] sm:$0xff] %vm738, %v687
        %773 = vst [vmem:[#allocation2 + $0x110] sm:$0xff] %v701
        %774 = vst.msk [vmem:[#allocation2 + $0x118] sm:$0xff] %vm592, %v689
        %v775 = vld [vmem:[%s344] sm:$0xff]
        %v776 = vld [vmem:[%s344 + $0x8] sm:$0xff]
        %v777 = vld [vmem:[%s344 + $0x10] sm:$0xff]
        %v778 = vld [vmem:[%s344 + $0x18] sm:$0xff]
        %v779 = vld [vmem:[%s344 + $0x20] sm:$0xff]
        %v780 = vld [vmem:[%s344 + $0x28] sm:$0xff]
        %v781 = vld [vmem:[%s344 + $0x30] sm:$0xff]
        %v782 = vld [vmem:[%s344 + $0x38] sm:$0xff]
        %v783 = vld [vmem:[%s344 + $0x40] sm:$0xff]
        %v784 = vld [vmem:[%s344 + $0x48] sm:$0xff]
        %v785 = vld [vmem:[%s344 + $0x50] sm:$0xff]
        %v786 = vld [vmem:[%s344 + $0x58] sm:$0xff]
        %v787 = vld [vmem:[%s1] sm:$0xf]
        %v788 = vld [vmem:[#allocation2] sm:$0xff]
        %v789 = vld [vmem:[#allocation2 + $0x8] sm:$0xff]
        %v790 = vld [vmem:[#allocation2 + $0x18] sm:$0xff]
        %v791 = vld [vmem:[#allocation2 + $0x20] sm:$0xff]
        %v792 = vld [vmem:[#allocation2 + $0x30] sm:$0xff]
        %v793 = vld [vmem:[#allocation2 + $0x38] sm:$0xff]
        %v794 = vld [vmem:[#allocation2 + $0x48] sm:$0xff]
        %v795 = vld [vmem:[#allocation2 + $0x50] sm:$0xff]
        %v796 = vld [vmem:[#allocation2 + $0x60] sm:$0xff]
        %v797 = vld [vmem:[#allocation2 + $0x68] sm:$0xff]
        %v798 = vld [vmem:[#allocation2 + $0x78] sm:$0xff]
        %v799 = vld [vmem:[#allocation2 + $0x80] sm:$0xff]
        %v800 = vld [vmem:[#allocation2 + $0x90] sm:$0xff]
        %v801 = vld [vmem:[#allocation2 + $0x98] sm:$0xff]
        %v802 = vld [vmem:[#allocation2 + $0xa8] sm:$0xff]
        %v803 = vld [vmem:[#allocation2 + $0xb0] sm:$0xff]
        %v804 = vld [vmem:[#allocation2 + $0xc0] sm:$0xff]
        %v805 = vld [vmem:[#allocation2 + $0xc8] sm:$0xff]
        %v806 = vld [vmem:[#allocation2 + $0xd8] sm:$0xff]
        %v807 = vld [vmem:[#allocation2 + $0xe0] sm:$0xff]
        %v808 = vld [vmem:[#allocation2 + $0xf0] sm:$0xff]
        %v809 = vld [vmem:[#allocation2 + $0xf8] sm:$0xff]
        %v810 = vld [vmem:[#allocation2 + $0x108] sm:$0xff]
        %v811 = vld [vmem:[#allocation2 + $0x110] sm:$0xff]
        %813 = vset.pattern.permute.xlu0 0
        %814 = vperm.xlu0 %813, %v775
        %v815 = vpop.permute.xlu0 %814
        %818 = vset.pattern.permute.xlu0 0
        %819 = vperm.xlu0 %818, %v776
        %v820 = vpop.permute.xlu0 %819
        %823 = vset.pattern.permute.xlu0 0
        %824 = vperm.xlu0 %823, %v777
        %v825 = vpop.permute.xlu0 %824
        %828 = vset.pattern.permute.xlu0 0
        %829 = vperm.xlu0 %828, %v778
        %v830 = vpop.permute.xlu0 %829
        %833 = vset.pattern.permute.xlu0 0
        %834 = vperm.xlu0 %833, %v779
        %v835 = vpop.permute.xlu0 %834
        %838 = vset.pattern.permute.xlu0 0
        %839 = vperm.xlu0 %838, %v780
        %v840 = vpop.permute.xlu0 %839
        %843 = vset.pattern.permute.xlu0 0
        %844 = vperm.xlu0 %843, %v781
        %v845 = vpop.permute.xlu0 %844
        %848 = vset.pattern.permute.xlu0 0
        %849 = vperm.xlu0 %848, %v782
        %v850 = vpop.permute.xlu0 %849
        %853 = vset.pattern.permute.xlu0 0
        %854 = vperm.xlu0 %853, %v783
        %v855 = vpop.permute.xlu0 %854
        %858 = vset.pattern.permute.xlu0 0
        %859 = vperm.xlu0 %858, %v784
        %v860 = vpop.permute.xlu0 %859
        %863 = vset.pattern.permute.xlu0 0
        %864 = vperm.xlu0 %863, %v785
        %v865 = vpop.permute.xlu0 %864
        %868 = vset.pattern.permute.xlu0 0
        %869 = vperm.xlu0 %868, %v786
        %v870 = vpop.permute.xlu0 %869
        %v872 = vmul.f32 %v815, %v788
        %v873 = vmul.f32 %v815, %v789
        %v874 = vmul.f32 %v820, %v790
        %v875 = vmul.f32 %v820, %v791
        %v876 = vmul.f32 %v825, %v792
        %v877 = vmul.f32 %v825, %v793
        %v878 = vmul.f32 %v830, %v794
        %v879 = vmul.f32 %v830, %v795
        %v880 = vmul.f32 %v835, %v796
        %v881 = vmul.f32 %v835, %v797
        %v882 = vmul.f32 %v840, %v798
        %v883 = vmul.f32 %v840, %v799
        %v884 = vmul.f32 %v845, %v800
        %v885 = vmul.f32 %v845, %v801
        %v886 = vmul.f32 %v850, %v802
        %v887 = vmul.f32 %v850, %v803
        %v888 = vmul.f32 %v855, %v804
        %v889 = vmul.f32 %v855, %v805
        %v890 = vmul.f32 %v860, %v806
        %v891 = vmul.f32 %v860, %v807
        %v892 = vmul.f32 %v865, %v808
        %v893 = vmul.f32 %v865, %v809
        %v894 = vmul.f32 %v870, %v810
        %v895 = vmul.f32 %v870, %v811
        %v896 = vadd.f32 %v872, 0.0
        %v897 = vadd.f32 %v873, 0.0
        %v898 = vadd.f32 %v874, 0.0
        %v899 = vadd.f32 %v875, 0.0
        %v900 = vadd.f32 %v876, 0.0
        %v901 = vadd.f32 %v877, 0.0
        %v902 = vadd.f32 %v878, 0.0
        %v903 = vadd.f32 %v879, 0.0
        %v904 = vadd.f32 %v880, 0.0
        %v905 = vadd.f32 %v881, 0.0
        %v906 = vadd.f32 %v882, 0.0
        %v907 = vadd.f32 %v883, 0.0
        %v908 = vadd.f32 %v884, 0.0
        %v909 = vadd.f32 %v885, 0.0
        %v910 = vadd.f32 %v886, 0.0
        %v911 = vadd.f32 %v887, 0.0
        %v912 = vadd.f32 %v888, 0.0
        %v913 = vadd.f32 %v889, 0.0
        %v914 = vadd.f32 %v890, 0.0
        %v915 = vadd.f32 %v891, 0.0
        %v916 = vadd.f32 %v892, 0.0
        %v917 = vadd.f32 %v893, 0.0
        %v918 = vadd.f32 %v894, 0.0
        %v919 = vadd.f32 %v895, 0.0
        %v920 = vld [vmem:[#allocation2] sm:$0xff]
        %v921 = vld [vmem:[#allocation2 + $0x8] sm:$0xff]
        %v922 = vld [vmem:[#allocation2 + $0x10] sm:$0xff]
        %v923 = vld [vmem:[#allocation2 + $0x18] sm:$0xff]
        %v924 = vld [vmem:[#allocation2 + $0x20] sm:$0xff]
        %v925 = vld [vmem:[#allocation2 + $0x28] sm:$0xff]
        %v926 = vld [vmem:[#allocation2 + $0x30] sm:$0xff]
        %v927 = vld [vmem:[#allocation2 + $0x38] sm:$0xff]
        %v928 = vld [vmem:[#allocation2 + $0x40] sm:$0xff]
        %v929 = vld [vmem:[#allocation2 + $0x48] sm:$0xff]
        %v930 = vld [vmem:[#allocation2 + $0x50] sm:$0xff]
        %v931 = vld [vmem:[#allocation2 + $0x58] sm:$0xff]
        %v932 = vld [vmem:[#allocation2 + $0x60] sm:$0xff]
        %v933 = vld [vmem:[#allocation2 + $0x68] sm:$0xff]
        %v934 = vld [vmem:[#allocation2 + $0x70] sm:$0xff]
        %v935 = vld [vmem:[#allocation2 + $0x78] sm:$0xff]
        %v936 = vld [vmem:[#allocation2 + $0x80] sm:$0xff]
        %v937 = vld [vmem:[#allocation2 + $0x88] sm:$0xff]
        %v938 = vld [vmem:[#allocation2 + $0x90] sm:$0xff]
        %v939 = vld [vmem:[#allocation2 + $0x98] sm:$0xff]
        %v940 = vld [vmem:[#allocation2 + $0xa0] sm:$0xff]
        %v941 = vld [vmem:[#allocation2 + $0xa8] sm:$0xff]
        %v942 = vld [vmem:[#allocation2 + $0xb0] sm:$0xff]
        %v943 = vld [vmem:[#allocation2 + $0xb8] sm:$0xff]
        %v944 = vld [vmem:[#allocation2 + $0xc0] sm:$0xff]
        %v945 = vld [vmem:[#allocation2 + $0xc8] sm:$0xff]
        %v946 = vld [vmem:[#allocation2 + $0xd0] sm:$0xff]
        %v947 = vld [vmem:[#allocation2 + $0xd8] sm:$0xff]
        %v948 = vld [vmem:[#allocation2 + $0xe0] sm:$0xff]
        %v949 = vld [vmem:[#allocation2 + $0xe8] sm:$0xff]
        %v950 = vld [vmem:[#allocation2 + $0xf0] sm:$0xff]
        %v951 = vld [vmem:[#allocation2 + $0xf8] sm:$0xff]
        %v952 = vld [vmem:[#allocation2 + $0x100] sm:$0xff]
        %v953 = vld [vmem:[#allocation2 + $0x108] sm:$0xff]
        %v954 = vld [vmem:[#allocation2 + $0x110] sm:$0xff]
        %v955 = vld [vmem:[#allocation2 + $0x118] sm:$0xff]
        %956 = vset.pattern.permute.xlu0 3
        %957 = vperm.xlu0 %956, %v775
        %v958 = vpop.permute.xlu0 %957
        %960 = vset.pattern.permute.xlu0 3
        %961 = vperm.xlu0 %960, %v776
        %v962 = vpop.permute.xlu0 %961
        %964 = vset.pattern.permute.xlu0 3
        %965 = vperm.xlu0 %964, %v777
        %v966 = vpop.permute.xlu0 %965
        %968 = vset.pattern.permute.xlu0 3
        %969 = vperm.xlu0 %968, %v778
        %v970 = vpop.permute.xlu0 %969
        %972 = vset.pattern.permute.xlu0 3
        %973 = vperm.xlu0 %972, %v779
        %v974 = vpop.permute.xlu0 %973
        %976 = vset.pattern.permute.xlu0 3
        %977 = vperm.xlu0 %976, %v780
        %v978 = vpop.permute.xlu0 %977
        %980 = vset.pattern.permute.xlu0 3
        %981 = vperm.xlu0 %980, %v781
        %v982 = vpop.permute.xlu0 %981
        %984 = vset.pattern.permute.xlu0 3
        %985 = vperm.xlu0 %984, %v782
        %v986 = vpop.permute.xlu0 %985
        %988 = vset.pattern.permute.xlu0 3
        %989 = vperm.xlu0 %988, %v783
        %v990 = vpop.permute.xlu0 %989
        %992 = vset.pattern.permute.xlu0 3
        %993 = vperm.xlu0 %992, %v784
        %v994 = vpop.permute.xlu0 %993
        %996 = vset.pattern.permute.xlu0 3
        %997 = vperm.xlu0 %996, %v785
        %v998 = vpop.permute.xlu0 %997
        %1000 = vset.pattern.permute.xlu0 3
        %1001 = vperm.xlu0 %1000, %v786
        %v1002 = vpop.permute.xlu0 %1001
        %v1004 = vmul.f32 %v958, %v920
        %v1005 = vmul.f32 %v958, %v921
        %v1006 = vmul.f32 %v958, %v922
        %v1007 = vmul.f32 %v962, %v923
        %v1008 = vmul.f32 %v962, %v924
        %v1009 = vmul.f32 %v962, %v925
        %v1010 = vmul.f32 %v966, %v926
        %v1011 = vmul.f32 %v966, %v927
        %v1012 = vmul.f32 %v966, %v928
        %v1013 = vmul.f32 %v970, %v929
        %v1014 = vmul.f32 %v970, %v930
        %v1015 = vmul.f32 %v970, %v931
        %v1016 = vmul.f32 %v974, %v932
        %v1017 = vmul.f32 %v974, %v933
        %v1018 = vmul.f32 %v974, %v934
        %v1019 = vmul.f32 %v978, %v935
        %v1020 = vmul.f32 %v978, %v936
        %v1021 = vmul.f32 %v978, %v937
        %v1022 = vmul.f32 %v982, %v938
        %v1023 = vmul.f32 %v982, %v939
        %v1024 = vmul.f32 %v982, %v940
        %v1025 = vmul.f32 %v986, %v941
        %v1026 = vmul.f32 %v986, %v942
        %v1027 = vmul.f32 %v986, %v943
        %v1028 = vmul.f32 %v990, %v944
        %v1029 = vmul.f32 %v990, %v945
        %v1030 = vmul.f32 %v990, %v946
        %v1031 = vmul.f32 %v994, %v947
        %v1032 = vmul.f32 %v994, %v948
        %v1033 = vmul.f32 %v994, %v949
        %v1034 = vmul.f32 %v998, %v950
        %v1035 = vmul.f32 %v998, %v951
        %v1036 = vmul.f32 %v998, %v952
        %v1037 = vmul.f32 %v1002, %v953
        %v1038 = vmul.f32 %v1002, %v954
        %v1039 = vmul.f32 %v1002, %v955
        %1076 = vrot.lane.b32.xlu0 %v1004, 96
        %v1077 = vpop.permute.xlu0 %1076
        %1078 = vrot.lane.b32.xlu0 %v1005, 96
        %v1079 = vpop.permute.xlu0 %1078
        %1080 = vrot.lane.b32.xlu0 %v1006, 96
        %v1081 = vpop.permute.xlu0 %1080
        %1082 = vrot.lane.b32.xlu0 %v1007, 96
        %v1083 = vpop.permute.xlu0 %1082
        %1084 = vrot.lane.b32.xlu0 %v1008, 96
        %v1085 = vpop.permute.xlu0 %1084
        %1086 = vrot.lane.b32.xlu0 %v1009, 96
        %v1087 = vpop.permute.xlu0 %1086
        %1088 = vrot.lane.b32.xlu0 %v1010, 96
        %v1089 = vpop.permute.xlu0 %1088
        %1090 = vrot.lane.b32.xlu0 %v1011, 96
        %v1091 = vpop.permute.xlu0 %1090
        %1092 = vrot.lane.b32.xlu0 %v1012, 96
        %v1093 = vpop.permute.xlu0 %1092
        %1094 = vrot.lane.b32.xlu0 %v1013, 96
        %v1095 = vpop.permute.xlu0 %1094
        %1096 = vrot.lane.b32.xlu0 %v1014, 96
        %v1097 = vpop.permute.xlu0 %1096
        %1098 = vrot.lane.b32.xlu0 %v1015, 96
        %v1099 = vpop.permute.xlu0 %1098
        %1100 = vrot.lane.b32.xlu0 %v1016, 96
        %v1101 = vpop.permute.xlu0 %1100
        %1102 = vrot.lane.b32.xlu0 %v1017, 96
        %v1103 = vpop.permute.xlu0 %1102
        %1104 = vrot.lane.b32.xlu0 %v1018, 96
        %v1105 = vpop.permute.xlu0 %1104
        %1106 = vrot.lane.b32.xlu0 %v1019, 96
        %v1107 = vpop.permute.xlu0 %1106
        %1108 = vrot.lane.b32.xlu0 %v1020, 96
        %v1109 = vpop.permute.xlu0 %1108
        %1110 = vrot.lane.b32.xlu0 %v1021, 96
        %v1111 = vpop.permute.xlu0 %1110
        %1112 = vrot.lane.b32.xlu0 %v1022, 96
        %v1113 = vpop.permute.xlu0 %1112
        %1114 = vrot.lane.b32.xlu0 %v1023, 96
        %v1115 = vpop.permute.xlu0 %1114
        %1116 = vrot.lane.b32.xlu0 %v1024, 96
        %v1117 = vpop.permute.xlu0 %1116
        %1118 = vrot.lane.b32.xlu0 %v1025, 96
        %v1119 = vpop.permute.xlu0 %1118
        %1120 = vrot.lane.b32.xlu0 %v1026, 96
        %v1121 = vpop.permute.xlu0 %1120
        %1122 = vrot.lane.b32.xlu0 %v1027, 96
        %v1123 = vpop.permute.xlu0 %1122
        %1124 = vrot.lane.b32.xlu0 %v1028, 96
        %v1125 = vpop.permute.xlu0 %1124
        %1126 = vrot.lane.b32.xlu0 %v1029, 96
        %v1127 = vpop.permute.xlu0 %1126
        %1128 = vrot.lane.b32.xlu0 %v1030, 96
        %v1129 = vpop.permute.xlu0 %1128
        %1130 = vrot.lane.b32.xlu0 %v1031, 96
        %v1131 = vpop.permute.xlu0 %1130
        %1132 = vrot.lane.b32.xlu0 %v1032, 96
        %v1133 = vpop.permute.xlu0 %1132
        %1134 = vrot.lane.b32.xlu0 %v1033, 96
        %v1135 = vpop.permute.xlu0 %1134
        %1136 = vrot.lane.b32.xlu0 %v1034, 96
        %v1137 = vpop.permute.xlu0 %1136
        %1138 = vrot.lane.b32.xlu0 %v1035, 96
        %v1139 = vpop.permute.xlu0 %1138
        %1140 = vrot.lane.b32.xlu0 %v1036, 96
        %v1141 = vpop.permute.xlu0 %1140
        %1142 = vrot.lane.b32.xlu0 %v1037, 96
        %v1143 = vpop.permute.xlu0 %1142
        %1144 = vrot.lane.b32.xlu0 %v1038, 96
        %v1145 = vpop.permute.xlu0 %1144
        %1146 = vrot.lane.b32.xlu0 %v1039, 96
        %v1147 = vpop.permute.xlu0 %1146
        %vm1148 = vcmask 785408
        %v1149 = vsel %vm1148, %v1077, %v1079
        %v1150 = vsel %vm1148, %v1079, %v1081
        %v1151 = vsel %vm1148, %v1083, %v1085
        %v1152 = vsel %vm1148, %v1085, %v1087
        %v1153 = vsel %vm1148, %v1089, %v1091
        %v1154 = vsel %vm1148, %v1091, %v1093
        %v1155 = vsel %vm1148, %v1095, %v1097
        %v1156 = vsel %vm1148, %v1097, %v1099
        %v1157 = vsel %vm1148, %v1101, %v1103
        %v1158 = vsel %vm1148, %v1103, %v1105
        %v1159 = vsel %vm1148, %v1107, %v1109
        %v1160 = vsel %vm1148, %v1109, %v1111
        %v1161 = vsel %vm1148, %v1113, %v1115
        %v1162 = vsel %vm1148, %v1115, %v1117
        %v1163 = vsel %vm1148, %v1119, %v1121
        %v1164 = vsel %vm1148, %v1121, %v1123
        %v1165 = vsel %vm1148, %v1125, %v1127
        %v1166 = vsel %vm1148, %v1127, %v1129
        %v1167 = vsel %vm1148, %v1131, %v1133
        %v1168 = vsel %vm1148, %v1133, %v1135
        %v1169 = vsel %vm1148, %v1137, %v1139
        %v1170 = vsel %vm1148, %v1139, %v1141
        %v1171 = vsel %vm1148, %v1143, %v1145
        %v1172 = vsel %vm1148, %v1145, %v1147
        %v1197 = vadd.f32 %v896, %v1149
        %v1198 = vadd.f32 %v897, %v1150
        %v1199 = vadd.f32 %v898, %v1151
        %v1200 = vadd.f32 %v899, %v1152
        %v1201 = vadd.f32 %v900, %v1153
        %v1202 = vadd.f32 %v901, %v1154
        %v1203 = vadd.f32 %v902, %v1155
        %v1204 = vadd.f32 %v903, %v1156
        %v1205 = vadd.f32 %v904, %v1157
        %v1206 = vadd.f32 %v905, %v1158
        %v1207 = vadd.f32 %v906, %v1159
        %v1208 = vadd.f32 %v907, %v1160
        %v1209 = vadd.f32 %v908, %v1161
        %v1210 = vadd.f32 %v909, %v1162
        %v1211 = vadd.f32 %v910, %v1163
        %v1212 = vadd.f32 %v911, %v1164
        %v1213 = vadd.f32 %v912, %v1165
        %v1214 = vadd.f32 %v913, %v1166
        %v1215 = vadd.f32 %v914, %v1167
        %v1216 = vadd.f32 %v915, %v1168
        %v1217 = vadd.f32 %v916, %v1169
        %v1218 = vadd.f32 %v917, %v1170
        %v1219 = vadd.f32 %v918, %v1171
        %v1220 = vadd.f32 %v919, %v1172
        %1221 = vset.pattern.permute.xlu0 6
        %1222 = vperm.xlu0 %1221, %v775
        %v1223 = vpop.permute.xlu0 %1222
        %1225 = vset.pattern.permute.xlu0 6
        %1226 = vperm.xlu0 %1225, %v776
        %v1227 = vpop.permute.xlu0 %1226
        %1229 = vset.pattern.permute.xlu0 6
        %1230 = vperm.xlu0 %1229, %v777
        %v1231 = vpop.permute.xlu0 %1230
        %1233 = vset.pattern.permute.xlu0 6
        %1234 = vperm.xlu0 %1233, %v778
        %v1235 = vpop.permute.xlu0 %1234
        %1237 = vset.pattern.permute.xlu0 6
        %1238 = vperm.xlu0 %1237, %v779
        %v1239 = vpop.permute.xlu0 %1238
        %1241 = vset.pattern.permute.xlu0 6
        %1242 = vperm.xlu0 %1241, %v780
        %v1243 = vpop.permute.xlu0 %1242
        %1245 = vset.pattern.permute.xlu0 6
        %1246 = vperm.xlu0 %1245, %v781
        %v1247 = vpop.permute.xlu0 %1246
        %1249 = vset.pattern.permute.xlu0 6
        %1250 = vperm.xlu0 %1249, %v782
        %v1251 = vpop.permute.xlu0 %1250
        %1253 = vset.pattern.permute.xlu0 6
        %1254 = vperm.xlu0 %1253, %v783
        %v1255 = vpop.permute.xlu0 %1254
        %1257 = vset.pattern.permute.xlu0 6
        %1258 = vperm.xlu0 %1257, %v784
        %v1259 = vpop.permute.xlu0 %1258
        %1261 = vset.pattern.permute.xlu0 6
        %1262 = vperm.xlu0 %1261, %v785
        %v1263 = vpop.permute.xlu0 %1262
        %1265 = vset.pattern.permute.xlu0 6
        %1266 = vperm.xlu0 %1265, %v786
        %v1267 = vpop.permute.xlu0 %1266
        %v1269 = vmul.f32 %v1223, %v920
        %v1270 = vmul.f32 %v1223, %v921
        %v1271 = vmul.f32 %v1223, %v922
        %v1272 = vmul.f32 %v1227, %v923
        %v1273 = vmul.f32 %v1227, %v924
        %v1274 = vmul.f32 %v1227, %v925
        %v1275 = vmul.f32 %v1231, %v926
        %v1276 = vmul.f32 %v1231, %v927
        %v1277 = vmul.f32 %v1231, %v928
        %v1278 = vmul.f32 %v1235, %v929
        %v1279 = vmul.f32 %v1235, %v930
        %v1280 = vmul.f32 %v1235, %v931
        %v1281 = vmul.f32 %v1239, %v932
        %v1282 = vmul.f32 %v1239, %v933
        %v1283 = vmul.f32 %v1239, %v934
        %v1284 = vmul.f32 %v1243, %v935
        %v1285 = vmul.f32 %v1243, %v936
        %v1286 = vmul.f32 %v1243, %v937
        %v1287 = vmul.f32 %v1247, %v938
        %v1288 = vmul.f32 %v1247, %v939
        %v1289 = vmul.f32 %v1247, %v940
        %v1290 = vmul.f32 %v1251, %v941
        %v1291 = vmul.f32 %v1251, %v942
        %v1292 = vmul.f32 %v1251, %v943
        %v1293 = vmul.f32 %v1255, %v944
        %v1294 = vmul.f32 %v1255, %v945
        %v1295 = vmul.f32 %v1255, %v946
        %v1296 = vmul.f32 %v1259, %v947
        %v1297 = vmul.f32 %v1259, %v948
        %v1298 = vmul.f32 %v1259, %v949
        %v1299 = vmul.f32 %v1263, %v950
        %v1300 = vmul.f32 %v1263, %v951
        %v1301 = vmul.f32 %v1263, %v952
        %v1302 = vmul.f32 %v1267, %v953
        %v1303 = vmul.f32 %v1267, %v954
        %v1304 = vmul.f32 %v1267, %v955
        %1341 = vrot.lane.b32.xlu0 %v1269, 64
        %v1342 = vpop.permute.xlu0 %1341
        %1343 = vrot.lane.b32.xlu0 %v1270, 64
        %v1344 = vpop.permute.xlu0 %1343
        %1345 = vrot.lane.b32.xlu0 %v1271, 64
        %v1346 = vpop.permute.xlu0 %1345
        %1347 = vrot.lane.b32.xlu0 %v1272, 64
        %v1348 = vpop.permute.xlu0 %1347
        %1349 = vrot.lane.b32.xlu0 %v1273, 64
        %v1350 = vpop.permute.xlu0 %1349
        %1351 = vrot.lane.b32.xlu0 %v1274, 64
        %v1352 = vpop.permute.xlu0 %1351
        %1353 = vrot.lane.b32.xlu0 %v1275, 64
        %v1354 = vpop.permute.xlu0 %1353
        %1355 = vrot.lane.b32.xlu0 %v1276, 64
        %v1356 = vpop.permute.xlu0 %1355
        %1357 = vrot.lane.b32.xlu0 %v1277, 64
        %v1358 = vpop.permute.xlu0 %1357
        %1359 = vrot.lane.b32.xlu0 %v1278, 64
        %v1360 = vpop.permute.xlu0 %1359
        %1361 = vrot.lane.b32.xlu0 %v1279, 64
        %v1362 = vpop.permute.xlu0 %1361
        %1363 = vrot.lane.b32.xlu0 %v1280, 64
        %v1364 = vpop.permute.xlu0 %1363
        %1365 = vrot.lane.b32.xlu0 %v1281, 64
        %v1366 = vpop.permute.xlu0 %1365
        %1367 = vrot.lane.b32.xlu0 %v1282, 64
        %v1368 = vpop.permute.xlu0 %1367
        %1369 = vrot.lane.b32.xlu0 %v1283, 64
        %v1370 = vpop.permute.xlu0 %1369
        %1371 = vrot.lane.b32.xlu0 %v1284, 64
        %v1372 = vpop.permute.xlu0 %1371
        %1373 = vrot.lane.b32.xlu0 %v1285, 64
        %v1374 = vpop.permute.xlu0 %1373
        %1375 = vrot.lane.b32.xlu0 %v1286, 64
        %v1376 = vpop.permute.xlu0 %1375
        %1377 = vrot.lane.b32.xlu0 %v1287, 64
        %v1378 = vpop.permute.xlu0 %1377
        %1379 = vrot.lane.b32.xlu0 %v1288, 64
        %v1380 = vpop.permute.xlu0 %1379
        %1381 = vrot.lane.b32.xlu0 %v1289, 64
        %v1382 = vpop.permute.xlu0 %1381
        %1383 = vrot.lane.b32.xlu0 %v1290, 64
        %v1384 = vpop.permute.xlu0 %1383
        %1385 = vrot.lane.b32.xlu0 %v1291, 64
        %v1386 = vpop.permute.xlu0 %1385
        %1387 = vrot.lane.b32.xlu0 %v1292, 64
        %v1388 = vpop.permute.xlu0 %1387
        %1389 = vrot.lane.b32.xlu0 %v1293, 64
        %v1390 = vpop.permute.xlu0 %1389
        %1391 = vrot.lane.b32.xlu0 %v1294, 64
        %v1392 = vpop.permute.xlu0 %1391
        %1393 = vrot.lane.b32.xlu0 %v1295, 64
        %v1394 = vpop.permute.xlu0 %1393
        %1395 = vrot.lane.b32.xlu0 %v1296, 64
        %v1396 = vpop.permute.xlu0 %1395
        %1397 = vrot.lane.b32.xlu0 %v1297, 64
        %v1398 = vpop.permute.xlu0 %1397
        %1399 = vrot.lane.b32.xlu0 %v1298, 64
        %v1400 = vpop.permute.xlu0 %1399
        %1401 = vrot.lane.b32.xlu0 %v1299, 64
        %v1402 = vpop.permute.xlu0 %1401
        %1403 = vrot.lane.b32.xlu0 %v1300, 64
        %v1404 = vpop.permute.xlu0 %1403
        %1405 = vrot.lane.b32.xlu0 %v1301, 64
        %v1406 = vpop.permute.xlu0 %1405
        %1407 = vrot.lane.b32.xlu0 %v1302, 64
        %v1408 = vpop.permute.xlu0 %1407
        %1409 = vrot.lane.b32.xlu0 %v1303, 64
        %v1410 = vpop.permute.xlu0 %1409
        %1411 = vrot.lane.b32.xlu0 %v1304, 64
        %v1412 = vpop.permute.xlu0 %1411
        %vm1413 = vcmask 523264
        %v1414 = vsel %vm1413, %v1342, %v1344
        %v1415 = vsel %vm1413, %v1344, %v1346
        %v1416 = vsel %vm1413, %v1348, %v1350
        %v1417 = vsel %vm1413, %v1350, %v1352
        %v1418 = vsel %vm1413, %v1354, %v1356
        %v1419 = vsel %vm1413, %v1356, %v1358
        %v1420 = vsel %vm1413, %v1360, %v1362
        %v1421 = vsel %vm1413, %v1362, %v1364
        %v1422 = vsel %vm1413, %v1366, %v1368
        %v1423 = vsel %vm1413, %v1368, %v1370
        %v1424 = vsel %vm1413, %v1372, %v1374
        %v1425 = vsel %vm1413, %v1374, %v1376
        %v1426 = vsel %vm1413, %v1378, %v1380
        %v1427 = vsel %vm1413, %v1380, %v1382
        %v1428 = vsel %vm1413, %v1384, %v1386
        %v1429 = vsel %vm1413, %v1386, %v1388
        %v1430 = vsel %vm1413, %v1390, %v1392
        %v1431 = vsel %vm1413, %v1392, %v1394
        %v1432 = vsel %vm1413, %v1396, %v1398
        %v1433 = vsel %vm1413, %v1398, %v1400
        %v1434 = vsel %vm1413, %v1402, %v1404
        %v1435 = vsel %vm1413, %v1404, %v1406
        %v1436 = vsel %vm1413, %v1408, %v1410
        %v1437 = vsel %vm1413, %v1410, %v1412
        %v1462 = vadd.f32 %v1197, %v1414
        %v1463 = vadd.f32 %v1198, %v1415
        %v1464 = vadd.f32 %v1199, %v1416
        %v1465 = vadd.f32 %v1200, %v1417
        %v1466 = vadd.f32 %v1201, %v1418
        %v1467 = vadd.f32 %v1202, %v1419
        %v1468 = vadd.f32 %v1203, %v1420
        %v1469 = vadd.f32 %v1204, %v1421
        %v1470 = vadd.f32 %v1205, %v1422
        %v1471 = vadd.f32 %v1206, %v1423
        %v1472 = vadd.f32 %v1207, %v1424
        %v1473 = vadd.f32 %v1208, %v1425
        %v1474 = vadd.f32 %v1209, %v1426
        %v1475 = vadd.f32 %v1210, %v1427
        %v1476 = vadd.f32 %v1211, %v1428
        %v1477 = vadd.f32 %v1212, %v1429
        %v1478 = vadd.f32 %v1213, %v1430
        %v1479 = vadd.f32 %v1214, %v1431
        %v1480 = vadd.f32 %v1215, %v1432
        %v1481 = vadd.f32 %v1216, %v1433
        %v1482 = vadd.f32 %v1217, %v1434
        %v1483 = vadd.f32 %v1218, %v1435
        %v1484 = vadd.f32 %v1219, %v1436
        %v1485 = vadd.f32 %v1220, %v1437
        %v1487 = vlaneseq
        %v1488 = vshrl.u32 %v1487, 7
        %v1489 = vsub.s32 0, %v1488
        %v1490 = vrot.slane %v787, %v1489
        %v1491 = vlaneseq
        %v1492 = vshrl.u32 %v1491, 7
        %v1493 = vsub.s32 2, %v1492
        %v1494 = vrot.slane %v787, %v1493
        %v1497 = vlaneseq
        %v1498 = vshrl.u32 %v1497, 7
        %v1499 = vsub.s32 0, %v1498
        %v1500 = vrot.slane %v1490, %v1499
        %v1501 = vlaneseq
        %v1502 = vshrl.u32 %v1501, 7
        %v1503 = vsub.s32 0, %v1502
        %v1504 = vrot.slane %v1494, %v1503
        %v1505 = vmul.f32 %v1462, %v1500
        %v1506 = vmul.f32 %v1463, %v1504
        %v1507 = vmul.f32 %v1464, %v1500
        %v1508 = vmul.f32 %v1465, %v1504
        %v1509 = vmul.f32 %v1466, %v1500
        %v1510 = vmul.f32 %v1467, %v1504
        %v1511 = vmul.f32 %v1468, %v1500
        %v1512 = vmul.f32 %v1469, %v1504
        %v1513 = vmul.f32 %v1470, %v1500
        %v1514 = vmul.f32 %v1471, %v1504
        %v1515 = vmul.f32 %v1472, %v1500
        %v1516 = vmul.f32 %v1473, %v1504
        %v1517 = vmul.f32 %v1474, %v1500
        %v1518 = vmul.f32 %v1475, %v1504
        %v1519 = vmul.f32 %v1476, %v1500
        %v1520 = vmul.f32 %v1477, %v1504
        %v1521 = vmul.f32 %v1478, %v1500
        %v1522 = vmul.f32 %v1479, %v1504
        %v1523 = vmul.f32 %v1480, %v1500
        %v1524 = vmul.f32 %v1481, %v1504
        %v1525 = vmul.f32 %v1482, %v1500
        %v1526 = vmul.f32 %v1483, %v1504
        %v1527 = vmul.f32 %v1484, %v1500
        %v1528 = vmul.f32 %v1485, %v1504
        %v1529 = vadd.f32 %v1505, 0.0
        %v1530 = vadd.f32 %v1506, 0.0
        %v1531 = vadd.f32 %v1507, 0.0
        %v1532 = vadd.f32 %v1508, 0.0
        %v1533 = vadd.f32 %v1509, 0.0
        %v1534 = vadd.f32 %v1510, 0.0
        %v1535 = vadd.f32 %v1511, 0.0
        %v1536 = vadd.f32 %v1512, 0.0
        %v1537 = vadd.f32 %v1513, 0.0
        %v1538 = vadd.f32 %v1514, 0.0
        %v1539 = vadd.f32 %v1515, 0.0
        %v1540 = vadd.f32 %v1516, 0.0
        %v1541 = vadd.f32 %v1517, 0.0
        %v1542 = vadd.f32 %v1518, 0.0
        %v1543 = vadd.f32 %v1519, 0.0
        %v1544 = vadd.f32 %v1520, 0.0
        %v1545 = vadd.f32 %v1521, 0.0
        %v1546 = vadd.f32 %v1522, 0.0
        %v1547 = vadd.f32 %v1523, 0.0
        %v1548 = vadd.f32 %v1524, 0.0
        %v1549 = vadd.f32 %v1525, 0.0
        %v1550 = vadd.f32 %v1526, 0.0
        %v1551 = vadd.f32 %v1527, 0.0
        %v1552 = vadd.f32 %v1528, 0.0
        %1553 = vset.pattern.permute.xlu0 1
        %1554 = vperm.xlu0 %1553, %v775
        %v1555 = vpop.permute.xlu0 %1554
        %1557 = vset.pattern.permute.xlu0 1
        %1558 = vperm.xlu0 %1557, %v776
        %v1559 = vpop.permute.xlu0 %1558
        %1561 = vset.pattern.permute.xlu0 1
        %1562 = vperm.xlu0 %1561, %v777
        %v1563 = vpop.permute.xlu0 %1562
        %1565 = vset.pattern.permute.xlu0 1
        %1566 = vperm.xlu0 %1565, %v778
        %v1567 = vpop.permute.xlu0 %1566
        %1569 = vset.pattern.permute.xlu0 1
        %1570 = vperm.xlu0 %1569, %v779
        %v1571 = vpop.permute.xlu0 %1570
        %1573 = vset.pattern.permute.xlu0 1
        %1574 = vperm.xlu0 %1573, %v780
        %v1575 = vpop.permute.xlu0 %1574
        %1577 = vset.pattern.permute.xlu0 1
        %1578 = vperm.xlu0 %1577, %v781
        %v1579 = vpop.permute.xlu0 %1578
        %1581 = vset.pattern.permute.xlu0 1
        %1582 = vperm.xlu0 %1581, %v782
        %v1583 = vpop.permute.xlu0 %1582
        %1585 = vset.pattern.permute.xlu0 1
        %1586 = vperm.xlu0 %1585, %v783
        %v1587 = vpop.permute.xlu0 %1586
        %1589 = vset.pattern.permute.xlu0 1
        %1590 = vperm.xlu0 %1589, %v784
        %v1591 = vpop.permute.xlu0 %1590
        %1593 = vset.pattern.permute.xlu0 1
        %1594 = vperm.xlu0 %1593, %v785
        %v1595 = vpop.permute.xlu0 %1594
        %1597 = vset.pattern.permute.xlu0 1
        %1598 = vperm.xlu0 %1597, %v786
        %v1599 = vpop.permute.xlu0 %1598
        %v1601 = vmul.f32 %v1555, %v920
        %v1602 = vmul.f32 %v1555, %v921
        %v1603 = vmul.f32 %v1555, %v922
        %v1604 = vmul.f32 %v1559, %v923
        %v1605 = vmul.f32 %v1559, %v924
        %v1606 = vmul.f32 %v1559, %v925
        %v1607 = vmul.f32 %v1563, %v926
        %v1608 = vmul.f32 %v1563, %v927
        %v1609 = vmul.f32 %v1563, %v928
        %v1610 = vmul.f32 %v1567, %v929
        %v1611 = vmul.f32 %v1567, %v930
        %v1612 = vmul.f32 %v1567, %v931
        %v1613 = vmul.f32 %v1571, %v932
        %v1614 = vmul.f32 %v1571, %v933
        %v1615 = vmul.f32 %v1571, %v934
        %v1616 = vmul.f32 %v1575, %v935
        %v1617 = vmul.f32 %v1575, %v936
        %v1618 = vmul.f32 %v1575, %v937
        %v1619 = vmul.f32 %v1579, %v938
        %v1620 = vmul.f32 %v1579, %v939
        %v1621 = vmul.f32 %v1579, %v940
        %v1622 = vmul.f32 %v1583, %v941
        %v1623 = vmul.f32 %v1583, %v942
        %v1624 = vmul.f32 %v1583, %v943
        %v1625 = vmul.f32 %v1587, %v944
        %v1626 = vmul.f32 %v1587, %v945
        %v1627 = vmul.f32 %v1587, %v946
        %v1628 = vmul.f32 %v1591, %v947
        %v1629 = vmul.f32 %v1591, %v948
        %v1630 = vmul.f32 %v1591, %v949
        %v1631 = vmul.f32 %v1595, %v950
        %v1632 = vmul.f32 %v1595, %v951
        %v1633 = vmul.f32 %v1595, %v952
        %v1634 = vmul.f32 %v1599, %v953
        %v1635 = vmul.f32 %v1599, %v954
        %v1636 = vmul.f32 %v1599, %v955
        %v1637 = vadd.f32 %v1601, 0.0
        %v1638 = vadd.f32 %v1602, 0.0
        %v1639 = vadd.f32 %v1603, 0.0
        %v1640 = vadd.f32 %v1604, 0.0
        %v1641 = vadd.f32 %v1605, 0.0
        %v1642 = vadd.f32 %v1606, 0.0
        %v1643 = vadd.f32 %v1607, 0.0
        %v1644 = vadd.f32 %v1608, 0.0
        %v1645 = vadd.f32 %v1609, 0.0
        %v1646 = vadd.f32 %v1610, 0.0
        %v1647 = vadd.f32 %v1611, 0.0
        %v1648 = vadd.f32 %v1612, 0.0
        %v1649 = vadd.f32 %v1613, 0.0
        %v1650 = vadd.f32 %v1614, 0.0
        %v1651 = vadd.f32 %v1615, 0.0
        %v1652 = vadd.f32 %v1616, 0.0
        %v1653 = vadd.f32 %v1617, 0.0
        %v1654 = vadd.f32 %v1618, 0.0
        %v1655 = vadd.f32 %v1619, 0.0
        %v1656 = vadd.f32 %v1620, 0.0
        %v1657 = vadd.f32 %v1621, 0.0
        %v1658 = vadd.f32 %v1622, 0.0
        %v1659 = vadd.f32 %v1623, 0.0
        %v1660 = vadd.f32 %v1624, 0.0
        %v1661 = vadd.f32 %v1625, 0.0
        %v1662 = vadd.f32 %v1626, 0.0
        %v1663 = vadd.f32 %v1627, 0.0
        %v1664 = vadd.f32 %v1628, 0.0
        %v1665 = vadd.f32 %v1629, 0.0
        %v1666 = vadd.f32 %v1630, 0.0
        %v1667 = vadd.f32 %v1631, 0.0
        %v1668 = vadd.f32 %v1632, 0.0
        %v1669 = vadd.f32 %v1633, 0.0
        %v1670 = vadd.f32 %v1634, 0.0
        %v1671 = vadd.f32 %v1635, 0.0
        %v1672 = vadd.f32 %v1636, 0.0
        %1673 = vset.pattern.permute.xlu0 4
        %1674 = vperm.xlu0 %1673, %v775
        %v1675 = vpop.permute.xlu0 %1674
        %1677 = vset.pattern.permute.xlu0 4
        %1678 = vperm.xlu0 %1677, %v776
        %v1679 = vpop.permute.xlu0 %1678
        %1681 = vset.pattern.permute.xlu0 4
        %1682 = vperm.xlu0 %1681, %v777
        %v1683 = vpop.permute.xlu0 %1682
        %1685 = vset.pattern.permute.xlu0 4
        %1686 = vperm.xlu0 %1685, %v778
        %v1687 = vpop.permute.xlu0 %1686
        %1689 = vset.pattern.permute.xlu0 4
        %1690 = vperm.xlu0 %1689, %v779
        %v1691 = vpop.permute.xlu0 %1690
        %1693 = vset.pattern.permute.xlu0 4
        %1694 = vperm.xlu0 %1693, %v780
        %v1695 = vpop.permute.xlu0 %1694
        %1697 = vset.pattern.permute.xlu0 4
        %1698 = vperm.xlu0 %1697, %v781
        %v1699 = vpop.permute.xlu0 %1698
        %1701 = vset.pattern.permute.xlu0 4
        %1702 = vperm.xlu0 %1701, %v782
        %v1703 = vpop.permute.xlu0 %1702
        %1705 = vset.pattern.permute.xlu0 4
        %1706 = vperm.xlu0 %1705, %v783
        %v1707 = vpop.permute.xlu0 %1706
        %1709 = vset.pattern.permute.xlu0 4
        %1710 = vperm.xlu0 %1709, %v784
        %v1711 = vpop.permute.xlu0 %1710
        %1713 = vset.pattern.permute.xlu0 4
        %1714 = vperm.xlu0 %1713, %v785
        %v1715 = vpop.permute.xlu0 %1714
        %1717 = vset.pattern.permute.xlu0 4
        %1718 = vperm.xlu0 %1717, %v786
        %v1719 = vpop.permute.xlu0 %1718
        %v1721 = vmul.f32 %v1675, %v920
        %v1722 = vmul.f32 %v1675, %v921
        %v1723 = vmul.f32 %v1675, %v922
        %v1724 = vmul.f32 %v1679, %v923
        %v1725 = vmul.f32 %v1679, %v924
        %v1726 = vmul.f32 %v1679, %v925
        %v1727 = vmul.f32 %v1683, %v926
        %v1728 = vmul.f32 %v1683, %v927
        %v1729 = vmul.f32 %v1683, %v928
        %v1730 = vmul.f32 %v1687, %v929
        %v1731 = vmul.f32 %v1687, %v930
        %v1732 = vmul.f32 %v1687, %v931
        %v1733 = vmul.f32 %v1691, %v932
        %v1734 = vmul.f32 %v1691, %v933
        %v1735 = vmul.f32 %v1691, %v934
        %v1736 = vmul.f32 %v1695, %v935
        %v1737 = vmul.f32 %v1695, %v936
        %v1738 = vmul.f32 %v1695, %v937
        %v1739 = vmul.f32 %v1699, %v938
        %v1740 = vmul.f32 %v1699, %v939
        %v1741 = vmul.f32 %v1699, %v940
        %v1742 = vmul.f32 %v1703, %v941
        %v1743 = vmul.f32 %v1703, %v942
        %v1744 = vmul.f32 %v1703, %v943
        %v1745 = vmul.f32 %v1707, %v944
        %v1746 = vmul.f32 %v1707, %v945
        %v1747 = vmul.f32 %v1707, %v946
        %v1748 = vmul.f32 %v1711, %v947
        %v1749 = vmul.f32 %v1711, %v948
        %v1750 = vmul.f32 %v1711, %v949
        %v1751 = vmul.f32 %v1715, %v950
        %v1752 = vmul.f32 %v1715, %v951
        %v1753 = vmul.f32 %v1715, %v952
        %v1754 = vmul.f32 %v1719, %v953
        %v1755 = vmul.f32 %v1719, %v954
        %v1756 = vmul.f32 %v1719, %v955
        %1793 = vrot.lane.b32.xlu0 %v1721, 96
        %v1794 = vpop.permute.xlu0 %1793
        %1795 = vrot.lane.b32.xlu0 %v1722, 96
        %v1796 = vpop.permute.xlu0 %1795
        %1797 = vrot.lane.b32.xlu0 %v1723, 96
        %v1798 = vpop.permute.xlu0 %1797
        %1799 = vrot.lane.b32.xlu0 %v1724, 96
        %v1800 = vpop.permute.xlu0 %1799
        %1801 = vrot.lane.b32.xlu0 %v1725, 96
        %v1802 = vpop.permute.xlu0 %1801
        %1803 = vrot.lane.b32.xlu0 %v1726, 96
        %v1804 = vpop.permute.xlu0 %1803
        %1805 = vrot.lane.b32.xlu0 %v1727, 96
        %v1806 = vpop.permute.xlu0 %1805
        %1807 = vrot.lane.b32.xlu0 %v1728, 96
        %v1808 = vpop.permute.xlu0 %1807
        %1809 = vrot.lane.b32.xlu0 %v1729, 96
        %v1810 = vpop.permute.xlu0 %1809
        %1811 = vrot.lane.b32.xlu0 %v1730, 96
        %v1812 = vpop.permute.xlu0 %1811
        %1813 = vrot.lane.b32.xlu0 %v1731, 96
        %v1814 = vpop.permute.xlu0 %1813
        %1815 = vrot.lane.b32.xlu0 %v1732, 96
        %v1816 = vpop.permute.xlu0 %1815
        %1817 = vrot.lane.b32.xlu0 %v1733, 96
        %v1818 = vpop.permute.xlu0 %1817
        %1819 = vrot.lane.b32.xlu0 %v1734, 96
        %v1820 = vpop.permute.xlu0 %1819
        %1821 = vrot.lane.b32.xlu0 %v1735, 96
        %v1822 = vpop.permute.xlu0 %1821
        %1823 = vrot.lane.b32.xlu0 %v1736, 96
        %v1824 = vpop.permute.xlu0 %1823
        %1825 = vrot.lane.b32.xlu0 %v1737, 96
        %v1826 = vpop.permute.xlu0 %1825
        %1827 = vrot.lane.b32.xlu0 %v1738, 96
        %v1828 = vpop.permute.xlu0 %1827
        %1829 = vrot.lane.b32.xlu0 %v1739, 96
        %v1830 = vpop.permute.xlu0 %1829
        %1831 = vrot.lane.b32.xlu0 %v1740, 96
        %v1832 = vpop.permute.xlu0 %1831
        %1833 = vrot.lane.b32.xlu0 %v1741, 96
        %v1834 = vpop.permute.xlu0 %1833
        %1835 = vrot.lane.b32.xlu0 %v1742, 96
        %v1836 = vpop.permute.xlu0 %1835
        %1837 = vrot.lane.b32.xlu0 %v1743, 96
        %v1838 = vpop.permute.xlu0 %1837
        %1839 = vrot.lane.b32.xlu0 %v1744, 96
        %v1840 = vpop.permute.xlu0 %1839
        %1841 = vrot.lane.b32.xlu0 %v1745, 96
        %v1842 = vpop.permute.xlu0 %1841
        %1843 = vrot.lane.b32.xlu0 %v1746, 96
        %v1844 = vpop.permute.xlu0 %1843
        %1845 = vrot.lane.b32.xlu0 %v1747, 96
        %v1846 = vpop.permute.xlu0 %1845
        %1847 = vrot.lane.b32.xlu0 %v1748, 96
        %v1848 = vpop.permute.xlu0 %1847
        %1849 = vrot.lane.b32.xlu0 %v1749, 96
        %v1850 = vpop.permute.xlu0 %1849
        %1851 = vrot.lane.b32.xlu0 %v1750, 96
        %v1852 = vpop.permute.xlu0 %1851
        %1853 = vrot.lane.b32.xlu0 %v1751, 96
        %v1854 = vpop.permute.xlu0 %1853
        %1855 = vrot.lane.b32.xlu0 %v1752, 96
        %v1856 = vpop.permute.xlu0 %1855
        %1857 = vrot.lane.b32.xlu0 %v1753, 96
        %v1858 = vpop.permute.xlu0 %1857
        %1859 = vrot.lane.b32.xlu0 %v1754, 96
        %v1860 = vpop.permute.xlu0 %1859
        %1861 = vrot.lane.b32.xlu0 %v1755, 96
        %v1862 = vpop.permute.xlu0 %1861
        %1863 = vrot.lane.b32.xlu0 %v1756, 96
        %v1864 = vpop.permute.xlu0 %1863
        %v1865 = vsel %vm1148, %v1794, %v1796
        %v1866 = vsel %vm1148, %v1796, %v1798
        %v1867 = vsel %vm1148, %v1800, %v1802
        %v1868 = vsel %vm1148, %v1802, %v1804
        %v1869 = vsel %vm1148, %v1806, %v1808
        %v1870 = vsel %vm1148, %v1808, %v1810
        %v1871 = vsel %vm1148, %v1812, %v1814
        %v1872 = vsel %vm1148, %v1814, %v1816
        %v1873 = vsel %vm1148, %v1818, %v1820
        %v1874 = vsel %vm1148, %v1820, %v1822
        %v1875 = vsel %vm1148, %v1824, %v1826
        %v1876 = vsel %vm1148, %v1826, %v1828
        %v1877 = vsel %vm1148, %v1830, %v1832
        %v1878 = vsel %vm1148, %v1832, %v1834
        %v1879 = vsel %vm1148, %v1836, %v1838
        %v1880 = vsel %vm1148, %v1838, %v1840
        %v1881 = vsel %vm1148, %v1842, %v1844
        %v1882 = vsel %vm1148, %v1844, %v1846
        %v1883 = vsel %vm1148, %v1848, %v1850
        %v1884 = vsel %vm1148, %v1850, %v1852
        %v1885 = vsel %vm1148, %v1854, %v1856
        %v1886 = vsel %vm1148, %v1856, %v1858
        %v1887 = vsel %vm1148, %v1860, %v1862
        %v1888 = vsel %vm1148, %v1862, %v1864
        %v1925 = vadd.f32 %v1637, %v1865
        %v1926 = vadd.f32 %v1638, %v1866
        %v1927 = vadd.f32 %v1639, %v1798
        %v1928 = vadd.f32 %v1640, %v1867
        %v1929 = vadd.f32 %v1641, %v1868
        %v1930 = vadd.f32 %v1642, %v1804
        %v1931 = vadd.f32 %v1643, %v1869
        %v1932 = vadd.f32 %v1644, %v1870
        %v1933 = vadd.f32 %v1645, %v1810
        %v1934 = vadd.f32 %v1646, %v1871
        %v1935 = vadd.f32 %v1647, %v1872
        %v1936 = vadd.f32 %v1648, %v1816
        %v1937 = vadd.f32 %v1649, %v1873
        %v1938 = vadd.f32 %v1650, %v1874
        %v1939 = vadd.f32 %v1651, %v1822
        %v1940 = vadd.f32 %v1652, %v1875
        %v1941 = vadd.f32 %v1653, %v1876
        %v1942 = vadd.f32 %v1654, %v1828
        %v1943 = vadd.f32 %v1655, %v1877
        %v1944 = vadd.f32 %v1656, %v1878
        %v1945 = vadd.f32 %v1657, %v1834
        %v1946 = vadd.f32 %v1658, %v1879
        %v1947 = vadd.f32 %v1659, %v1880
        %v1948 = vadd.f32 %v1660, %v1840
        %v1949 = vadd.f32 %v1661, %v1881
        %v1950 = vadd.f32 %v1662, %v1882
        %v1951 = vadd.f32 %v1663, %v1846
        %v1952 = vadd.f32 %v1664, %v1883
        %v1953 = vadd.f32 %v1665, %v1884
        %v1954 = vadd.f32 %v1666, %v1852
        %v1955 = vadd.f32 %v1667, %v1885
        %v1956 = vadd.f32 %v1668, %v1886
        %v1957 = vadd.f32 %v1669, %v1858
        %v1958 = vadd.f32 %v1670, %v1887
        %v1959 = vadd.f32 %v1671, %v1888
        %v1960 = vadd.f32 %v1672, %v1864
        %1961 = vset.pattern.permute.xlu0 7
        %1962 = vperm.xlu0 %1961, %v775
        %v1963 = vpop.permute.xlu0 %1962
        %1965 = vset.pattern.permute.xlu0 7
        %1966 = vperm.xlu0 %1965, %v776
        %v1967 = vpop.permute.xlu0 %1966
        %1969 = vset.pattern.permute.xlu0 7
        %1970 = vperm.xlu0 %1969, %v777
        %v1971 = vpop.permute.xlu0 %1970
        %1973 = vset.pattern.permute.xlu0 7
        %1974 = vperm.xlu0 %1973, %v778
        %v1975 = vpop.permute.xlu0 %1974
        %1977 = vset.pattern.permute.xlu0 7
        %1978 = vperm.xlu0 %1977, %v779
        %v1979 = vpop.permute.xlu0 %1978
        %1981 = vset.pattern.permute.xlu0 7
        %1982 = vperm.xlu0 %1981, %v780
        %v1983 = vpop.permute.xlu0 %1982
        %1985 = vset.pattern.permute.xlu0 7
        %1986 = vperm.xlu0 %1985, %v781
        %v1987 = vpop.permute.xlu0 %1986
        %1989 = vset.pattern.permute.xlu0 7
        %1990 = vperm.xlu0 %1989, %v782
        %v1991 = vpop.permute.xlu0 %1990
        %1993 = vset.pattern.permute.xlu0 7
        %1994 = vperm.xlu0 %1993, %v783
        %v1995 = vpop.permute.xlu0 %1994
        %1997 = vset.pattern.permute.xlu0 7
        %1998 = vperm.xlu0 %1997, %v784
        %v1999 = vpop.permute.xlu0 %1998
        %2001 = vset.pattern.permute.xlu0 7
        %2002 = vperm.xlu0 %2001, %v785
        %v2003 = vpop.permute.xlu0 %2002
        %2005 = vset.pattern.permute.xlu0 7
        %2006 = vperm.xlu0 %2005, %v786
        %v2007 = vpop.permute.xlu0 %2006
        %v2009 = vmul.f32 %v1963, %v920
        %v2010 = vmul.f32 %v1963, %v921
        %v2011 = vmul.f32 %v1963, %v922
        %v2012 = vmul.f32 %v1967, %v923
        %v2013 = vmul.f32 %v1967, %v924
        %v2014 = vmul.f32 %v1967, %v925
        %v2015 = vmul.f32 %v1971, %v926
        %v2016 = vmul.f32 %v1971, %v927
        %v2017 = vmul.f32 %v1971, %v928
        %v2018 = vmul.f32 %v1975, %v929
        %v2019 = vmul.f32 %v1975, %v930
        %v2020 = vmul.f32 %v1975, %v931
        %v2021 = vmul.f32 %v1979, %v932
        %v2022 = vmul.f32 %v1979, %v933
        %v2023 = vmul.f32 %v1979, %v934
        %v2024 = vmul.f32 %v1983, %v935
        %v2025 = vmul.f32 %v1983, %v936
        %v2026 = vmul.f32 %v1983, %v937
        %v2027 = vmul.f32 %v1987, %v938
        %v2028 = vmul.f32 %v1987, %v939
        %v2029 = vmul.f32 %v1987, %v940
        %v2030 = vmul.f32 %v1991, %v941
        %v2031 = vmul.f32 %v1991, %v942
        %v2032 = vmul.f32 %v1991, %v943
        %v2033 = vmul.f32 %v1995, %v944
        %v2034 = vmul.f32 %v1995, %v945
        %v2035 = vmul.f32 %v1995, %v946
        %v2036 = vmul.f32 %v1999, %v947
        %v2037 = vmul.f32 %v1999, %v948
        %v2038 = vmul.f32 %v1999, %v949
        %v2039 = vmul.f32 %v2003, %v950
        %v2040 = vmul.f32 %v2003, %v951
        %v2041 = vmul.f32 %v2003, %v952
        %v2042 = vmul.f32 %v2007, %v953
        %v2043 = vmul.f32 %v2007, %v954
        %v2044 = vmul.f32 %v2007, %v955
        %2081 = vrot.lane.b32.xlu0 %v2009, 64
        %v2082 = vpop.permute.xlu0 %2081
        %2083 = vrot.lane.b32.xlu0 %v2010, 64
        %v2084 = vpop.permute.xlu0 %2083
        %2085 = vrot.lane.b32.xlu0 %v2011, 64
        %v2086 = vpop.permute.xlu0 %2085
        %2087 = vrot.lane.b32.xlu0 %v2012, 64
        %v2088 = vpop.permute.xlu0 %2087
        %2089 = vrot.lane.b32.xlu0 %v2013, 64
        %v2090 = vpop.permute.xlu0 %2089
        %2091 = vrot.lane.b32.xlu0 %v2014, 64
        %v2092 = vpop.permute.xlu0 %2091
        %2093 = vrot.lane.b32.xlu0 %v2015, 64
        %v2094 = vpop.permute.xlu0 %2093
        %2095 = vrot.lane.b32.xlu0 %v2016, 64
        %v2096 = vpop.permute.xlu0 %2095
        %2097 = vrot.lane.b32.xlu0 %v2017, 64
        %v2098 = vpop.permute.xlu0 %2097
        %2099 = vrot.lane.b32.xlu0 %v2018, 64
        %v2100 = vpop.permute.xlu0 %2099
        %2101 = vrot.lane.b32.xlu0 %v2019, 64
        %v2102 = vpop.permute.xlu0 %2101
        %2103 = vrot.lane.b32.xlu0 %v2020, 64
        %v2104 = vpop.permute.xlu0 %2103
        %2105 = vrot.lane.b32.xlu0 %v2021, 64
        %v2106 = vpop.permute.xlu0 %2105
        %2107 = vrot.lane.b32.xlu0 %v2022, 64
        %v2108 = vpop.permute.xlu0 %2107
        %2109 = vrot.lane.b32.xlu0 %v2023, 64
        %v2110 = vpop.permute.xlu0 %2109
        %2111 = vrot.lane.b32.xlu0 %v2024, 64
        %v2112 = vpop.permute.xlu0 %2111
        %2113 = vrot.lane.b32.xlu0 %v2025, 64
        %v2114 = vpop.permute.xlu0 %2113
        %2115 = vrot.lane.b32.xlu0 %v2026, 64
        %v2116 = vpop.permute.xlu0 %2115
        %2117 = vrot.lane.b32.xlu0 %v2027, 64
        %v2118 = vpop.permute.xlu0 %2117
        %2119 = vrot.lane.b32.xlu0 %v2028, 64
        %v2120 = vpop.permute.xlu0 %2119
        %2121 = vrot.lane.b32.xlu0 %v2029, 64
        %v2122 = vpop.permute.xlu0 %2121
        %2123 = vrot.lane.b32.xlu0 %v2030, 64
        %v2124 = vpop.permute.xlu0 %2123
        %2125 = vrot.lane.b32.xlu0 %v2031, 64
        %v2126 = vpop.permute.xlu0 %2125
        %2127 = vrot.lane.b32.xlu0 %v2032, 64
        %v2128 = vpop.permute.xlu0 %2127
        %2129 = vrot.lane.b32.xlu0 %v2033, 64
        %v2130 = vpop.permute.xlu0 %2129
        %2131 = vrot.lane.b32.xlu0 %v2034, 64
        %v2132 = vpop.permute.xlu0 %2131
        %2133 = vrot.lane.b32.xlu0 %v2035, 64
        %v2134 = vpop.permute.xlu0 %2133
        %2135 = vrot.lane.b32.xlu0 %v2036, 64
        %v2136 = vpop.permute.xlu0 %2135
        %2137 = vrot.lane.b32.xlu0 %v2037, 64
        %v2138 = vpop.permute.xlu0 %2137
        %2139 = vrot.lane.b32.xlu0 %v2038, 64
        %v2140 = vpop.permute.xlu0 %2139
        %2141 = vrot.lane.b32.xlu0 %v2039, 64
        %v2142 = vpop.permute.xlu0 %2141
        %2143 = vrot.lane.b32.xlu0 %v2040, 64
        %v2144 = vpop.permute.xlu0 %2143
        %2145 = vrot.lane.b32.xlu0 %v2041, 64
        %v2146 = vpop.permute.xlu0 %2145
        %2147 = vrot.lane.b32.xlu0 %v2042, 64
        %v2148 = vpop.permute.xlu0 %2147
        %2149 = vrot.lane.b32.xlu0 %v2043, 64
        %v2150 = vpop.permute.xlu0 %2149
        %2151 = vrot.lane.b32.xlu0 %v2044, 64
        %v2152 = vpop.permute.xlu0 %2151
        %v2153 = vsel %vm1413, %v2082, %v2084
        %v2154 = vsel %vm1413, %v2084, %v2086
        %v2155 = vsel %vm1413, %v2088, %v2090
        %v2156 = vsel %vm1413, %v2090, %v2092
        %v2157 = vsel %vm1413, %v2094, %v2096
        %v2158 = vsel %vm1413, %v2096, %v2098
        %v2159 = vsel %vm1413, %v2100, %v2102
        %v2160 = vsel %vm1413, %v2102, %v2104
        %v2161 = vsel %vm1413, %v2106, %v2108
        %v2162 = vsel %vm1413, %v2108, %v2110
        %v2163 = vsel %vm1413, %v2112, %v2114
        %v2164 = vsel %vm1413, %v2114, %v2116
        %v2165 = vsel %vm1413, %v2118, %v2120
        %v2166 = vsel %vm1413, %v2120, %v2122
        %v2167 = vsel %vm1413, %v2124, %v2126
        %v2168 = vsel %vm1413, %v2126, %v2128
        %v2169 = vsel %vm1413, %v2130, %v2132
        %v2170 = vsel %vm1413, %v2132, %v2134
        %v2171 = vsel %vm1413, %v2136, %v2138
        %v2172 = vsel %vm1413, %v2138, %v2140
        %v2173 = vsel %vm1413, %v2142, %v2144
        %v2174 = vsel %vm1413, %v2144, %v2146
        %v2175 = vsel %vm1413, %v2148, %v2150
        %v2176 = vsel %vm1413, %v2150, %v2152
        %v2213 = vadd.f32 %v1925, %v2153
        %v2214 = vadd.f32 %v1926, %v2154
        %v2215 = vadd.f32 %v1927, %v2086
        %v2216 = vadd.f32 %v1928, %v2155
        %v2217 = vadd.f32 %v1929, %v2156
        %v2218 = vadd.f32 %v1930, %v2092
        %v2219 = vadd.f32 %v1931, %v2157
        %v2220 = vadd.f32 %v1932, %v2158
        %v2221 = vadd.f32 %v1933, %v2098
        %v2222 = vadd.f32 %v1934, %v2159
        %v2223 = vadd.f32 %v1935, %v2160
        %v2224 = vadd.f32 %v1936, %v2104
        %v2225 = vadd.f32 %v1937, %v2161
        %v2226 = vadd.f32 %v1938, %v2162
        %v2227 = vadd.f32 %v1939, %v2110
        %v2228 = vadd.f32 %v1940, %v2163
        %v2229 = vadd.f32 %v1941, %v2164
        %v2230 = vadd.f32 %v1942, %v2116
        %v2231 = vadd.f32 %v1943, %v2165
        %v2232 = vadd.f32 %v1944, %v2166
        %v2233 = vadd.f32 %v1945, %v2122
        %v2234 = vadd.f32 %v1946, %v2167
        %v2235 = vadd.f32 %v1947, %v2168
        %v2236 = vadd.f32 %v1948, %v2128
        %v2237 = vadd.f32 %v1949, %v2169
        %v2238 = vadd.f32 %v1950, %v2170
        %v2239 = vadd.f32 %v1951, %v2134
        %v2240 = vadd.f32 %v1952, %v2171
        %v2241 = vadd.f32 %v1953, %v2172
        %v2242 = vadd.f32 %v1954, %v2140
        %v2243 = vadd.f32 %v1955, %v2173
        %v2244 = vadd.f32 %v1956, %v2174
        %v2245 = vadd.f32 %v1957, %v2146
        %v2246 = vadd.f32 %v1958, %v2175
        %v2247 = vadd.f32 %v1959, %v2176
        %v2248 = vadd.f32 %v1960, %v2152
        %2285 = vrot.lane.b32.xlu0 %v2213, 126
        %v2286 = vpop.permute.xlu0 %2285
        %2287 = vrot.lane.b32.xlu0 %v2214, 126
        %v2288 = vpop.permute.xlu0 %2287
        %2289 = vrot.lane.b32.xlu0 %v2215, 126
        %v2290 = vpop.permute.xlu0 %2289
        %2291 = vrot.lane.b32.xlu0 %v2216, 126
        %v2292 = vpop.permute.xlu0 %2291
        %2293 = vrot.lane.b32.xlu0 %v2217, 126
        %v2294 = vpop.permute.xlu0 %2293
        %2295 = vrot.lane.b32.xlu0 %v2218, 126
        %v2296 = vpop.permute.xlu0 %2295
        %2297 = vrot.lane.b32.xlu0 %v2219, 126
        %v2298 = vpop.permute.xlu0 %2297
        %2299 = vrot.lane.b32.xlu0 %v2220, 126
        %v2300 = vpop.permute.xlu0 %2299
        %2301 = vrot.lane.b32.xlu0 %v2221, 126
        %v2302 = vpop.permute.xlu0 %2301
        %2303 = vrot.lane.b32.xlu0 %v2222, 126
        %v2304 = vpop.permute.xlu0 %2303
        %2305 = vrot.lane.b32.xlu0 %v2223, 126
        %v2306 = vpop.permute.xlu0 %2305
        %2307 = vrot.lane.b32.xlu0 %v2224, 126
        %v2308 = vpop.permute.xlu0 %2307
        %2309 = vrot.lane.b32.xlu0 %v2225, 126
        %v2310 = vpop.permute.xlu0 %2309
        %2311 = vrot.lane.b32.xlu0 %v2226, 126
        %v2312 = vpop.permute.xlu0 %2311
        %2313 = vrot.lane.b32.xlu0 %v2227, 126
        %v2314 = vpop.permute.xlu0 %2313
        %2315 = vrot.lane.b32.xlu0 %v2228, 126
        %v2316 = vpop.permute.xlu0 %2315
        %2317 = vrot.lane.b32.xlu0 %v2229, 126
        %v2318 = vpop.permute.xlu0 %2317
        %2319 = vrot.lane.b32.xlu0 %v2230, 126
        %v2320 = vpop.permute.xlu0 %2319
        %2321 = vrot.lane.b32.xlu0 %v2231, 126
        %v2322 = vpop.permute.xlu0 %2321
        %2323 = vrot.lane.b32.xlu0 %v2232, 126
        %v2324 = vpop.permute.xlu0 %2323
        %2325 = vrot.lane.b32.xlu0 %v2233, 126
        %v2326 = vpop.permute.xlu0 %2325
        %2327 = vrot.lane.b32.xlu0 %v2234, 126
        %v2328 = vpop.permute.xlu0 %2327
        %2329 = vrot.lane.b32.xlu0 %v2235, 126
        %v2330 = vpop.permute.xlu0 %2329
        %2331 = vrot.lane.b32.xlu0 %v2236, 126
        %v2332 = vpop.permute.xlu0 %2331
        %2333 = vrot.lane.b32.xlu0 %v2237, 126
        %v2334 = vpop.permute.xlu0 %2333
        %2335 = vrot.lane.b32.xlu0 %v2238, 126
        %v2336 = vpop.permute.xlu0 %2335
        %2337 = vrot.lane.b32.xlu0 %v2239, 126
        %v2338 = vpop.permute.xlu0 %2337
        %2339 = vrot.lane.b32.xlu0 %v2240, 126
        %v2340 = vpop.permute.xlu0 %2339
        %2341 = vrot.lane.b32.xlu0 %v2241, 126
        %v2342 = vpop.permute.xlu0 %2341
        %2343 = vrot.lane.b32.xlu0 %v2242, 126
        %v2344 = vpop.permute.xlu0 %2343
        %2345 = vrot.lane.b32.xlu0 %v2243, 126
        %v2346 = vpop.permute.xlu0 %2345
        %2347 = vrot.lane.b32.xlu0 %v2244, 126
        %v2348 = vpop.permute.xlu0 %2347
        %2349 = vrot.lane.b32.xlu0 %v2245, 126
        %v2350 = vpop.permute.xlu0 %2349
        %2351 = vrot.lane.b32.xlu0 %v2246, 126
        %v2352 = vpop.permute.xlu0 %2351
        %2353 = vrot.lane.b32.xlu0 %v2247, 126
        %v2354 = vpop.permute.xlu0 %2353
        %2355 = vrot.lane.b32.xlu0 %v2248, 126
        %v2356 = vpop.permute.xlu0 %2355
        %vm2357 = vcmask 1031168
        %v2358 = vsel %vm2357, %v2286, %v2288
        %v2359 = vsel %vm2357, %v2288, %v2290
        %v2360 = vsel %vm2357, %v2292, %v2294
        %v2361 = vsel %vm2357, %v2294, %v2296
        %v2362 = vsel %vm2357, %v2298, %v2300
        %v2363 = vsel %vm2357, %v2300, %v2302
        %v2364 = vsel %vm2357, %v2304, %v2306
        %v2365 = vsel %vm2357, %v2306, %v2308
        %v2366 = vsel %vm2357, %v2310, %v2312
        %v2367 = vsel %vm2357, %v2312, %v2314
        %v2368 = vsel %vm2357, %v2316, %v2318
        %v2369 = vsel %vm2357, %v2318, %v2320
        %v2370 = vsel %vm2357, %v2322, %v2324
        %v2371 = vsel %vm2357, %v2324, %v2326
        %v2372 = vsel %vm2357, %v2328, %v2330
        %v2373 = vsel %vm2357, %v2330, %v2332
        %v2374 = vsel %vm2357, %v2334, %v2336
        %v2375 = vsel %vm2357, %v2336, %v2338
        %v2376 = vsel %vm2357, %v2340, %v2342
        %v2377 = vsel %vm2357, %v2342, %v2344
        %v2378 = vsel %vm2357, %v2346, %v2348
        %v2379 = vsel %vm2357, %v2348, %v2350
        %v2380 = vsel %vm2357, %v2352, %v2354
        %v2381 = vsel %vm2357, %v2354, %v2356
        %v2406 = vadd.f32 %v1529, %v2358
        %v2407 = vadd.f32 %v1530, %v2359
        %v2408 = vadd.f32 %v1531, %v2360
        %v2409 = vadd.f32 %v1532, %v2361
        %v2410 = vadd.f32 %v1533, %v2362
        %v2411 = vadd.f32 %v1534, %v2363
        %v2412 = vadd.f32 %v1535, %v2364
        %v2413 = vadd.f32 %v1536, %v2365
        %v2414 = vadd.f32 %v1537, %v2366
        %v2415 = vadd.f32 %v1538, %v2367
        %v2416 = vadd.f32 %v1539, %v2368
        %v2417 = vadd.f32 %v1540, %v2369
        %v2418 = vadd.f32 %v1541, %v2370
        %v2419 = vadd.f32 %v1542, %v2371
        %v2420 = vadd.f32 %v1543, %v2372
        %v2421 = vadd.f32 %v1544, %v2373
        %v2422 = vadd.f32 %v1545, %v2374
        %v2423 = vadd.f32 %v1546, %v2375
        %v2424 = vadd.f32 %v1547, %v2376
        %v2425 = vadd.f32 %v1548, %v2377
        %v2426 = vadd.f32 %v1549, %v2378
        %v2427 = vadd.f32 %v1550, %v2379
        %v2428 = vadd.f32 %v1551, %v2380
        %v2429 = vadd.f32 %v1552, %v2381
        %2430 = vset.pattern.permute.xlu0 2
        %2431 = vperm.xlu0 %2430, %v775
        %v2432 = vpop.permute.xlu0 %2431
        %2434 = vset.pattern.permute.xlu0 2
        %2435 = vperm.xlu0 %2434, %v776
        %v2436 = vpop.permute.xlu0 %2435
        %2438 = vset.pattern.permute.xlu0 2
        %2439 = vperm.xlu0 %2438, %v777
        %v2440 = vpop.permute.xlu0 %2439
        %2442 = vset.pattern.permute.xlu0 2
        %2443 = vperm.xlu0 %2442, %v778
        %v2444 = vpop.permute.xlu0 %2443
        %2446 = vset.pattern.permute.xlu0 2
        %2447 = vperm.xlu0 %2446, %v779
        %v2448 = vpop.permute.xlu0 %2447
        %2450 = vset.pattern.permute.xlu0 2
        %2451 = vperm.xlu0 %2450, %v780
        %v2452 = vpop.permute.xlu0 %2451
        %2454 = vset.pattern.permute.xlu0 2
        %2455 = vperm.xlu0 %2454, %v781
        %v2456 = vpop.permute.xlu0 %2455
        %2458 = vset.pattern.permute.xlu0 2
        %2459 = vperm.xlu0 %2458, %v782
        %v2460 = vpop.permute.xlu0 %2459
        %2462 = vset.pattern.permute.xlu0 2
        %2463 = vperm.xlu0 %2462, %v783
        %v2464 = vpop.permute.xlu0 %2463
        %2466 = vset.pattern.permute.xlu0 2
        %2467 = vperm.xlu0 %2466, %v784
        %v2468 = vpop.permute.xlu0 %2467
        %2470 = vset.pattern.permute.xlu0 2
        %2471 = vperm.xlu0 %2470, %v785
        %v2472 = vpop.permute.xlu0 %2471
        %2474 = vset.pattern.permute.xlu0 2
        %2475 = vperm.xlu0 %2474, %v786
        %v2476 = vpop.permute.xlu0 %2475
        %v2478 = vmul.f32 %v2432, %v920
        %v2479 = vmul.f32 %v2432, %v921
        %v2480 = vmul.f32 %v2432, %v922
        %v2481 = vmul.f32 %v2436, %v923
        %v2482 = vmul.f32 %v2436, %v924
        %v2483 = vmul.f32 %v2436, %v925
        %v2484 = vmul.f32 %v2440, %v926
        %v2485 = vmul.f32 %v2440, %v927
        %v2486 = vmul.f32 %v2440, %v928
        %v2487 = vmul.f32 %v2444, %v929
        %v2488 = vmul.f32 %v2444, %v930
        %v2489 = vmul.f32 %v2444, %v931
        %v2490 = vmul.f32 %v2448, %v932
        %v2491 = vmul.f32 %v2448, %v933
        %v2492 = vmul.f32 %v2448, %v934
        %v2493 = vmul.f32 %v2452, %v935
        %v2494 = vmul.f32 %v2452, %v936
        %v2495 = vmul.f32 %v2452, %v937
        %v2496 = vmul.f32 %v2456, %v938
        %v2497 = vmul.f32 %v2456, %v939
        %v2498 = vmul.f32 %v2456, %v940
        %v2499 = vmul.f32 %v2460, %v941
        %v2500 = vmul.f32 %v2460, %v942
        %v2501 = vmul.f32 %v2460, %v943
        %v2502 = vmul.f32 %v2464, %v944
        %v2503 = vmul.f32 %v2464, %v945
        %v2504 = vmul.f32 %v2464, %v946
        %v2505 = vmul.f32 %v2468, %v947
        %v2506 = vmul.f32 %v2468, %v948
        %v2507 = vmul.f32 %v2468, %v949
        %v2508 = vmul.f32 %v2472, %v950
        %v2509 = vmul.f32 %v2472, %v951
        %v2510 = vmul.f32 %v2472, %v952
        %v2511 = vmul.f32 %v2476, %v953
        %v2512 = vmul.f32 %v2476, %v954
        %v2513 = vmul.f32 %v2476, %v955
        %v2514 = vadd.f32 %v2478, 0.0
        %v2515 = vadd.f32 %v2479, 0.0
        %v2516 = vadd.f32 %v2480, 0.0
        %v2517 = vadd.f32 %v2481, 0.0
        %v2518 = vadd.f32 %v2482, 0.0
        %v2519 = vadd.f32 %v2483, 0.0
        %v2520 = vadd.f32 %v2484, 0.0
        %v2521 = vadd.f32 %v2485, 0.0
        %v2522 = vadd.f32 %v2486, 0.0
        %v2523 = vadd.f32 %v2487, 0.0
        %v2524 = vadd.f32 %v2488, 0.0
        %v2525 = vadd.f32 %v2489, 0.0
        %v2526 = vadd.f32 %v2490, 0.0
        %v2527 = vadd.f32 %v2491, 0.0
        %v2528 = vadd.f32 %v2492, 0.0
        %v2529 = vadd.f32 %v2493, 0.0
        %v2530 = vadd.f32 %v2494, 0.0
        %v2531 = vadd.f32 %v2495, 0.0
        %v2532 = vadd.f32 %v2496, 0.0
        %v2533 = vadd.f32 %v2497, 0.0
        %v2534 = vadd.f32 %v2498, 0.0
        %v2535 = vadd.f32 %v2499, 0.0
        %v2536 = vadd.f32 %v2500, 0.0
        %v2537 = vadd.f32 %v2501, 0.0
        %v2538 = vadd.f32 %v2502, 0.0
        %v2539 = vadd.f32 %v2503, 0.0
        %v2540 = vadd.f32 %v2504, 0.0
        %v2541 = vadd.f32 %v2505, 0.0
        %v2542 = vadd.f32 %v2506, 0.0
        %v2543 = vadd.f32 %v2507, 0.0
        %v2544 = vadd.f32 %v2508, 0.0
        %v2545 = vadd.f32 %v2509, 0.0
        %v2546 = vadd.f32 %v2510, 0.0
        %v2547 = vadd.f32 %v2511, 0.0
        %v2548 = vadd.f32 %v2512, 0.0
        %v2549 = vadd.f32 %v2513, 0.0
        %2550 = vset.pattern.permute.xlu0 5
        %2551 = vperm.xlu0 %2550, %v775
        %v2552 = vpop.permute.xlu0 %2551
        %2554 = vset.pattern.permute.xlu0 5
        %2555 = vperm.xlu0 %2554, %v776
        %v2556 = vpop.permute.xlu0 %2555
        %2558 = vset.pattern.permute.xlu0 5
        %2559 = vperm.xlu0 %2558, %v777
        %v2560 = vpop.permute.xlu0 %2559
        %2562 = vset.pattern.permute.xlu0 5
        %2563 = vperm.xlu0 %2562, %v778
        %v2564 = vpop.permute.xlu0 %2563
        %2566 = vset.pattern.permute.xlu0 5
        %2567 = vperm.xlu0 %2566, %v779
        %v2568 = vpop.permute.xlu0 %2567
        %2570 = vset.pattern.permute.xlu0 5
        %2571 = vperm.xlu0 %2570, %v780
        %v2572 = vpop.permute.xlu0 %2571
        %2574 = vset.pattern.permute.xlu0 5
        %2575 = vperm.xlu0 %2574, %v781
        %v2576 = vpop.permute.xlu0 %2575
        %2578 = vset.pattern.permute.xlu0 5
        %2579 = vperm.xlu0 %2578, %v782
        %v2580 = vpop.permute.xlu0 %2579
        %2582 = vset.pattern.permute.xlu0 5
        %2583 = vperm.xlu0 %2582, %v783
        %v2584 = vpop.permute.xlu0 %2583
        %2586 = vset.pattern.permute.xlu0 5
        %2587 = vperm.xlu0 %2586, %v784
        %v2588 = vpop.permute.xlu0 %2587
        %2590 = vset.pattern.permute.xlu0 5
        %2591 = vperm.xlu0 %2590, %v785
        %v2592 = vpop.permute.xlu0 %2591
        %2594 = vset.pattern.permute.xlu0 5
        %2595 = vperm.xlu0 %2594, %v786
        %v2596 = vpop.permute.xlu0 %2595
        %v2598 = vmul.f32 %v2552, %v920
        %v2599 = vmul.f32 %v2552, %v921
        %v2600 = vmul.f32 %v2552, %v922
        %v2601 = vmul.f32 %v2556, %v923
        %v2602 = vmul.f32 %v2556, %v924
        %v2603 = vmul.f32 %v2556, %v925
        %v2604 = vmul.f32 %v2560, %v926
        %v2605 = vmul.f32 %v2560, %v927
        %v2606 = vmul.f32 %v2560, %v928
        %v2607 = vmul.f32 %v2564, %v929
        %v2608 = vmul.f32 %v2564, %v930
        %v2609 = vmul.f32 %v2564, %v931
        %v2610 = vmul.f32 %v2568, %v932
        %v2611 = vmul.f32 %v2568, %v933
        %v2612 = vmul.f32 %v2568, %v934
        %v2613 = vmul.f32 %v2572, %v935
        %v2614 = vmul.f32 %v2572, %v936
        %v2615 = vmul.f32 %v2572, %v937
        %v2616 = vmul.f32 %v2576, %v938
        %v2617 = vmul.f32 %v2576, %v939
        %v2618 = vmul.f32 %v2576, %v940
        %v2619 = vmul.f32 %v2580, %v941
        %v2620 = vmul.f32 %v2580, %v942
        %v2621 = vmul.f32 %v2580, %v943
        %v2622 = vmul.f32 %v2584, %v944
        %v2623 = vmul.f32 %v2584, %v945
        %v2624 = vmul.f32 %v2584, %v946
        %v2625 = vmul.f32 %v2588, %v947
        %v2626 = vmul.f32 %v2588, %v948
        %v2627 = vmul.f32 %v2588, %v949
        %v2628 = vmul.f32 %v2592, %v950
        %v2629 = vmul.f32 %v2592, %v951
        %v2630 = vmul.f32 %v2592, %v952
        %v2631 = vmul.f32 %v2596, %v953
        %v2632 = vmul.f32 %v2596, %v954
        %v2633 = vmul.f32 %v2596, %v955
        %2670 = vrot.lane.b32.xlu0 %v2598, 96
        %v2671 = vpop.permute.xlu0 %2670
        %2672 = vrot.lane.b32.xlu0 %v2599, 96
        %v2673 = vpop.permute.xlu0 %2672
        %2674 = vrot.lane.b32.xlu0 %v2600, 96
        %v2675 = vpop.permute.xlu0 %2674
        %2676 = vrot.lane.b32.xlu0 %v2601, 96
        %v2677 = vpop.permute.xlu0 %2676
        %2678 = vrot.lane.b32.xlu0 %v2602, 96
        %v2679 = vpop.permute.xlu0 %2678
        %2680 = vrot.lane.b32.xlu0 %v2603, 96
        %v2681 = vpop.permute.xlu0 %2680
        %2682 = vrot.lane.b32.xlu0 %v2604, 96
        %v2683 = vpop.permute.xlu0 %2682
        %2684 = vrot.lane.b32.xlu0 %v2605, 96
        %v2685 = vpop.permute.xlu0 %2684
        %2686 = vrot.lane.b32.xlu0 %v2606, 96
        %v2687 = vpop.permute.xlu0 %2686
        %2688 = vrot.lane.b32.xlu0 %v2607, 96
        %v2689 = vpop.permute.xlu0 %2688
        %2690 = vrot.lane.b32.xlu0 %v2608, 96
        %v2691 = vpop.permute.xlu0 %2690
        %2692 = vrot.lane.b32.xlu0 %v2609, 96
        %v2693 = vpop.permute.xlu0 %2692
        %2694 = vrot.lane.b32.xlu0 %v2610, 96
        %v2695 = vpop.permute.xlu0 %2694
        %2696 = vrot.lane.b32.xlu0 %v2611, 96
        %v2697 = vpop.permute.xlu0 %2696
        %2698 = vrot.lane.b32.xlu0 %v2612, 96
        %v2699 = vpop.permute.xlu0 %2698
        %2700 = vrot.lane.b32.xlu0 %v2613, 96
        %v2701 = vpop.permute.xlu0 %2700
        %2702 = vrot.lane.b32.xlu0 %v2614, 96
        %v2703 = vpop.permute.xlu0 %2702
        %2704 = vrot.lane.b32.xlu0 %v2615, 96
        %v2705 = vpop.permute.xlu0 %2704
        %2706 = vrot.lane.b32.xlu0 %v2616, 96
        %v2707 = vpop.permute.xlu0 %2706
        %2708 = vrot.lane.b32.xlu0 %v2617, 96
        %v2709 = vpop.permute.xlu0 %2708
        %2710 = vrot.lane.b32.xlu0 %v2618, 96
        %v2711 = vpop.permute.xlu0 %2710
        %2712 = vrot.lane.b32.xlu0 %v2619, 96
        %v2713 = vpop.permute.xlu0 %2712
        %2714 = vrot.lane.b32.xlu0 %v2620, 96
        %v2715 = vpop.permute.xlu0 %2714
        %2716 = vrot.lane.b32.xlu0 %v2621, 96
        %v2717 = vpop.permute.xlu0 %2716
        %2718 = vrot.lane.b32.xlu0 %v2622, 96
        %v2719 = vpop.permute.xlu0 %2718
        %2720 = vrot.lane.b32.xlu0 %v2623, 96
        %v2721 = vpop.permute.xlu0 %2720
        %2722 = vrot.lane.b32.xlu0 %v2624, 96
        %v2723 = vpop.permute.xlu0 %2722
        %2724 = vrot.lane.b32.xlu0 %v2625, 96
        %v2725 = vpop.permute.xlu0 %2724
        %2726 = vrot.lane.b32.xlu0 %v2626, 96
        %v2727 = vpop.permute.xlu0 %2726
        %2728 = vrot.lane.b32.xlu0 %v2627, 96
        %v2729 = vpop.permute.xlu0 %2728
        %2730 = vrot.lane.b32.xlu0 %v2628, 96
        %v2731 = vpop.permute.xlu0 %2730
        %2732 = vrot.lane.b32.xlu0 %v2629, 96
        %v2733 = vpop.permute.xlu0 %2732
        %2734 = vrot.lane.b32.xlu0 %v2630, 96
        %v2735 = vpop.permute.xlu0 %2734
        %2736 = vrot.lane.b32.xlu0 %v2631, 96
        %v2737 = vpop.permute.xlu0 %2736
        %2738 = vrot.lane.b32.xlu0 %v2632, 96
        %v2739 = vpop.permute.xlu0 %2738
        %2740 = vrot.lane.b32.xlu0 %v2633, 96
        %v2741 = vpop.permute.xlu0 %2740
        %v2742 = vsel %vm1148, %v2671, %v2673
        %v2743 = vsel %vm1148, %v2673, %v2675
        %v2744 = vsel %vm1148, %v2677, %v2679
        %v2745 = vsel %vm1148, %v2679, %v2681
        %v2746 = vsel %vm1148, %v2683, %v2685
        %v2747 = vsel %vm1148, %v2685, %v2687
        %v2748 = vsel %vm1148, %v2689, %v2691
        %v2749 = vsel %vm1148, %v2691, %v2693
        %v2750 = vsel %vm1148, %v2695, %v2697
        %v2751 = vsel %vm1148, %v2697, %v2699
        %v2752 = vsel %vm1148, %v2701, %v2703
        %v2753 = vsel %vm1148, %v2703, %v2705
        %v2754 = vsel %vm1148, %v2707, %v2709
        %v2755 = vsel %vm1148, %v2709, %v2711
        %v2756 = vsel %vm1148, %v2713, %v2715
        %v2757 = vsel %vm1148, %v2715, %v2717
        %v2758 = vsel %vm1148, %v2719, %v2721
        %v2759 = vsel %vm1148, %v2721, %v2723
        %v2760 = vsel %vm1148, %v2725, %v2727
        %v2761 = vsel %vm1148, %v2727, %v2729
        %v2762 = vsel %vm1148, %v2731, %v2733
        %v2763 = vsel %vm1148, %v2733, %v2735
        %v2764 = vsel %vm1148, %v2737, %v2739
        %v2765 = vsel %vm1148, %v2739, %v2741
        %v2802 = vadd.f32 %v2514, %v2742
        %v2803 = vadd.f32 %v2515, %v2743
        %v2804 = vadd.f32 %v2516, %v2675
        %v2805 = vadd.f32 %v2517, %v2744
        %v2806 = vadd.f32 %v2518, %v2745
        %v2807 = vadd.f32 %v2519, %v2681
        %v2808 = vadd.f32 %v2520, %v2746
        %v2809 = vadd.f32 %v2521, %v2747
        %v2810 = vadd.f32 %v2522, %v2687
        %v2811 = vadd.f32 %v2523, %v2748
        %v2812 = vadd.f32 %v2524, %v2749
        %v2813 = vadd.f32 %v2525, %v2693
        %v2814 = vadd.f32 %v2526, %v2750
        %v2815 = vadd.f32 %v2527, %v2751
        %v2816 = vadd.f32 %v2528, %v2699
        %v2817 = vadd.f32 %v2529, %v2752
        %v2818 = vadd.f32 %v2530, %v2753
        %v2819 = vadd.f32 %v2531, %v2705
        %v2820 = vadd.f32 %v2532, %v2754
        %v2821 = vadd.f32 %v2533, %v2755
        %v2822 = vadd.f32 %v2534, %v2711
        %v2823 = vadd.f32 %v2535, %v2756
        %v2824 = vadd.f32 %v2536, %v2757
        %v2825 = vadd.f32 %v2537, %v2717
        %v2826 = vadd.f32 %v2538, %v2758
        %v2827 = vadd.f32 %v2539, %v2759
        %v2828 = vadd.f32 %v2540, %v2723
        %v2829 = vadd.f32 %v2541, %v2760
        %v2830 = vadd.f32 %v2542, %v2761
        %v2831 = vadd.f32 %v2543, %v2729
        %v2832 = vadd.f32 %v2544, %v2762
        %v2833 = vadd.f32 %v2545, %v2763
        %v2834 = vadd.f32 %v2546, %v2735
        %v2835 = vadd.f32 %v2547, %v2764
        %v2836 = vadd.f32 %v2548, %v2765
        %v2837 = vadd.f32 %v2549, %v2741
        %2838 = vset.pattern.permute.xlu0 8
        %2839 = vperm.xlu0 %2838, %v775
        %v2840 = vpop.permute.xlu0 %2839
        %2842 = vset.pattern.permute.xlu0 8
        %2843 = vperm.xlu0 %2842, %v776
        %v2844 = vpop.permute.xlu0 %2843
        %2846 = vset.pattern.permute.xlu0 8
        %2847 = vperm.xlu0 %2846, %v777
        %v2848 = vpop.permute.xlu0 %2847
        %2850 = vset.pattern.permute.xlu0 8
        %2851 = vperm.xlu0 %2850, %v778
        %v2852 = vpop.permute.xlu0 %2851
        %2854 = vset.pattern.permute.xlu0 8
        %2855 = vperm.xlu0 %2854, %v779
        %v2856 = vpop.permute.xlu0 %2855
        %2858 = vset.pattern.permute.xlu0 8
        %2859 = vperm.xlu0 %2858, %v780
        %v2860 = vpop.permute.xlu0 %2859
        %2862 = vset.pattern.permute.xlu0 8
        %2863 = vperm.xlu0 %2862, %v781
        %v2864 = vpop.permute.xlu0 %2863
        %2866 = vset.pattern.permute.xlu0 8
        %2867 = vperm.xlu0 %2866, %v782
        %v2868 = vpop.permute.xlu0 %2867
        %2870 = vset.pattern.permute.xlu0 8
        %2871 = vperm.xlu0 %2870, %v783
        %v2872 = vpop.permute.xlu0 %2871
        %2874 = vset.pattern.permute.xlu0 8
        %2875 = vperm.xlu0 %2874, %v784
        %v2876 = vpop.permute.xlu0 %2875
        %2878 = vset.pattern.permute.xlu0 8
        %2879 = vperm.xlu0 %2878, %v785
        %v2880 = vpop.permute.xlu0 %2879
        %2882 = vset.pattern.permute.xlu0 8
        %2883 = vperm.xlu0 %2882, %v786
        %v2884 = vpop.permute.xlu0 %2883
        %v2886 = vmul.f32 %v2840, %v920
        %v2887 = vmul.f32 %v2840, %v921
        %v2888 = vmul.f32 %v2840, %v922
        %v2889 = vmul.f32 %v2844, %v923
        %v2890 = vmul.f32 %v2844, %v924
        %v2891 = vmul.f32 %v2844, %v925
        %v2892 = vmul.f32 %v2848, %v926
        %v2893 = vmul.f32 %v2848, %v927
        %v2894 = vmul.f32 %v2848, %v928
        %v2895 = vmul.f32 %v2852, %v929
        %v2896 = vmul.f32 %v2852, %v930
        %v2897 = vmul.f32 %v2852, %v931
        %v2898 = vmul.f32 %v2856, %v932
        %v2899 = vmul.f32 %v2856, %v933
        %v2900 = vmul.f32 %v2856, %v934
        %v2901 = vmul.f32 %v2860, %v935
        %v2902 = vmul.f32 %v2860, %v936
        %v2903 = vmul.f32 %v2860, %v937
        %v2904 = vmul.f32 %v2864, %v938
        %v2905 = vmul.f32 %v2864, %v939
        %v2906 = vmul.f32 %v2864, %v940
        %v2907 = vmul.f32 %v2868, %v941
        %v2908 = vmul.f32 %v2868, %v942
        %v2909 = vmul.f32 %v2868, %v943
        %v2910 = vmul.f32 %v2872, %v944
        %v2911 = vmul.f32 %v2872, %v945
        %v2912 = vmul.f32 %v2872, %v946
        %v2913 = vmul.f32 %v2876, %v947
        %v2914 = vmul.f32 %v2876, %v948
        %v2915 = vmul.f32 %v2876, %v949
        %v2916 = vmul.f32 %v2880, %v950
        %v2917 = vmul.f32 %v2880, %v951
        %v2918 = vmul.f32 %v2880, %v952
        %v2919 = vmul.f32 %v2884, %v953
        %v2920 = vmul.f32 %v2884, %v954
        %v2921 = vmul.f32 %v2884, %v955
        %2958 = vrot.lane.b32.xlu0 %v2886, 64
        %v2959 = vpop.permute.xlu0 %2958
        %2960 = vrot.lane.b32.xlu0 %v2887, 64
        %v2961 = vpop.permute.xlu0 %2960
        %2962 = vrot.lane.b32.xlu0 %v2888, 64
        %v2963 = vpop.permute.xlu0 %2962
        %2964 = vrot.lane.b32.xlu0 %v2889, 64
        %v2965 = vpop.permute.xlu0 %2964
        %2966 = vrot.lane.b32.xlu0 %v2890, 64
        %v2967 = vpop.permute.xlu0 %2966
        %2968 = vrot.lane.b32.xlu0 %v2891, 64
        %v2969 = vpop.permute.xlu0 %2968
        %2970 = vrot.lane.b32.xlu0 %v2892, 64
        %v2971 = vpop.permute.xlu0 %2970
        %2972 = vrot.lane.b32.xlu0 %v2893, 64
        %v2973 = vpop.permute.xlu0 %2972
        %2974 = vrot.lane.b32.xlu0 %v2894, 64
        %v2975 = vpop.permute.xlu0 %2974
        %2976 = vrot.lane.b32.xlu0 %v2895, 64
        %v2977 = vpop.permute.xlu0 %2976
        %2978 = vrot.lane.b32.xlu0 %v2896, 64
        %v2979 = vpop.permute.xlu0 %2978
        %2980 = vrot.lane.b32.xlu0 %v2897, 64
        %v2981 = vpop.permute.xlu0 %2980
        %2982 = vrot.lane.b32.xlu0 %v2898, 64
        %v2983 = vpop.permute.xlu0 %2982
        %2984 = vrot.lane.b32.xlu0 %v2899, 64
        %v2985 = vpop.permute.xlu0 %2984
        %2986 = vrot.lane.b32.xlu0 %v2900, 64
        %v2987 = vpop.permute.xlu0 %2986
        %2988 = vrot.lane.b32.xlu0 %v2901, 64
        %v2989 = vpop.permute.xlu0 %2988
        %2990 = vrot.lane.b32.xlu0 %v2902, 64
        %v2991 = vpop.permute.xlu0 %2990
        %2992 = vrot.lane.b32.xlu0 %v2903, 64
        %v2993 = vpop.permute.xlu0 %2992
        %2994 = vrot.lane.b32.xlu0 %v2904, 64
        %v2995 = vpop.permute.xlu0 %2994
        %2996 = vrot.lane.b32.xlu0 %v2905, 64
        %v2997 = vpop.permute.xlu0 %2996
        %2998 = vrot.lane.b32.xlu0 %v2906, 64
        %v2999 = vpop.permute.xlu0 %2998
        %3000 = vrot.lane.b32.xlu0 %v2907, 64
        %v3001 = vpop.permute.xlu0 %3000
        %3002 = vrot.lane.b32.xlu0 %v2908, 64
        %v3003 = vpop.permute.xlu0 %3002
        %3004 = vrot.lane.b32.xlu0 %v2909, 64
        %v3005 = vpop.permute.xlu0 %3004
        %3006 = vrot.lane.b32.xlu0 %v2910, 64
        %v3007 = vpop.permute.xlu0 %3006
        %3008 = vrot.lane.b32.xlu0 %v2911, 64
        %v3009 = vpop.permute.xlu0 %3008
        %3010 = vrot.lane.b32.xlu0 %v2912, 64
        %v3011 = vpop.permute.xlu0 %3010
        %3012 = vrot.lane.b32.xlu0 %v2913, 64
        %v3013 = vpop.permute.xlu0 %3012
        %3014 = vrot.lane.b32.xlu0 %v2914, 64
        %v3015 = vpop.permute.xlu0 %3014
        %3016 = vrot.lane.b32.xlu0 %v2915, 64
        %v3017 = vpop.permute.xlu0 %3016
        %3018 = vrot.lane.b32.xlu0 %v2916, 64
        %v3019 = vpop.permute.xlu0 %3018
        %3020 = vrot.lane.b32.xlu0 %v2917, 64
        %v3021 = vpop.permute.xlu0 %3020
        %3022 = vrot.lane.b32.xlu0 %v2918, 64
        %v3023 = vpop.permute.xlu0 %3022
        %3024 = vrot.lane.b32.xlu0 %v2919, 64
        %v3025 = vpop.permute.xlu0 %3024
        %3026 = vrot.lane.b32.xlu0 %v2920, 64
        %v3027 = vpop.permute.xlu0 %3026
        %3028 = vrot.lane.b32.xlu0 %v2921, 64
        %v3029 = vpop.permute.xlu0 %3028
        %v3030 = vsel %vm1413, %v2959, %v2961
        %v3031 = vsel %vm1413, %v2961, %v2963
        %v3032 = vsel %vm1413, %v2965, %v2967
        %v3033 = vsel %vm1413, %v2967, %v2969
        %v3034 = vsel %vm1413, %v2971, %v2973
        %v3035 = vsel %vm1413, %v2973, %v2975
        %v3036 = vsel %vm1413, %v2977, %v2979
        %v3037 = vsel %vm1413, %v2979, %v2981
        %v3038 = vsel %vm1413, %v2983, %v2985
        %v3039 = vsel %vm1413, %v2985, %v2987
        %v3040 = vsel %vm1413, %v2989, %v2991
        %v3041 = vsel %vm1413, %v2991, %v2993
        %v3042 = vsel %vm1413, %v2995, %v2997
        %v3043 = vsel %vm1413, %v2997, %v2999
        %v3044 = vsel %vm1413, %v3001, %v3003
        %v3045 = vsel %vm1413, %v3003, %v3005
        %v3046 = vsel %vm1413, %v3007, %v3009
        %v3047 = vsel %vm1413, %v3009, %v3011
        %v3048 = vsel %vm1413, %v3013, %v3015
        %v3049 = vsel %vm1413, %v3015, %v3017
        %v3050 = vsel %vm1413, %v3019, %v3021
        %v3051 = vsel %vm1413, %v3021, %v3023
        %v3052 = vsel %vm1413, %v3025, %v3027
        %v3053 = vsel %vm1413, %v3027, %v3029
        %v3090 = vadd.f32 %v2802, %v3030
        %v3091 = vadd.f32 %v2803, %v3031
        %v3092 = vadd.f32 %v2804, %v2963
        %v3093 = vadd.f32 %v2805, %v3032
        %v3094 = vadd.f32 %v2806, %v3033
        %v3095 = vadd.f32 %v2807, %v2969
        %v3096 = vadd.f32 %v2808, %v3034
        %v3097 = vadd.f32 %v2809, %v3035
        %v3098 = vadd.f32 %v2810, %v2975
        %v3099 = vadd.f32 %v2811, %v3036
        %v3100 = vadd.f32 %v2812, %v3037
        %v3101 = vadd.f32 %v2813, %v2981
        %v3102 = vadd.f32 %v2814, %v3038
        %v3103 = vadd.f32 %v2815, %v3039
        %v3104 = vadd.f32 %v2816, %v2987
        %v3105 = vadd.f32 %v2817, %v3040
        %v3106 = vadd.f32 %v2818, %v3041
        %v3107 = vadd.f32 %v2819, %v2993
        %v3108 = vadd.f32 %v2820, %v3042
        %v3109 = vadd.f32 %v2821, %v3043
        %v3110 = vadd.f32 %v2822, %v2999
        %v3111 = vadd.f32 %v2823, %v3044
        %v3112 = vadd.f32 %v2824, %v3045
        %v3113 = vadd.f32 %v2825, %v3005
        %v3114 = vadd.f32 %v2826, %v3046
        %v3115 = vadd.f32 %v2827, %v3047
        %v3116 = vadd.f32 %v2828, %v3011
        %v3117 = vadd.f32 %v2829, %v3048
        %v3118 = vadd.f32 %v2830, %v3049
        %v3119 = vadd.f32 %v2831, %v3017
        %v3120 = vadd.f32 %v2832, %v3050
        %v3121 = vadd.f32 %v2833, %v3051
        %v3122 = vadd.f32 %v2834, %v3023
        %v3123 = vadd.f32 %v2835, %v3052
        %v3124 = vadd.f32 %v2836, %v3053
        %v3125 = vadd.f32 %v2837, %v3029
        %v3126 = vlaneseq
        %v3127 = vshrl.u32 %v3126, 7
        %v3128 = vsub.s32 1, %v3127
        %v3129 = vrot.slane %v787, %v3128
        %v3130 = vlaneseq
        %v3131 = vshrl.u32 %v3130, 7
        %v3132 = vsub.s32 3, %v3131
        %v3133 = vrot.slane %v787, %v3132
        %v3136 = vlaneseq
        %v3137 = vshrl.u32 %v3136, 7
        %v3138 = vsub.s32 1, %v3137
        %v3139 = vrot.slane %v3129, %v3138
        %v3140 = vlaneseq
        %v3141 = vshrl.u32 %v3140, 7
        %v3142 = vsub.s32 1, %v3141
        %v3143 = vrot.slane %v3133, %v3142
        %3146 = vrot.lane.b32.xlu0 %v3139, 4
        %v3147 = vpop.permute.xlu0 %3146
        %3148 = vrot.lane.b32.xlu0 %v3143, 4
        %v3149 = vpop.permute.xlu0 %3148
        %vm3150 = vcmask 31744
        %v3151 = vsel %vm3150, %v3147, %v3149
        %v3155 = vmul.f32 %v3090, %v3147
        %v3156 = vmul.f32 %v3091, %v3151
        %v3157 = vmul.f32 %v3092, %v3149
        %v3158 = vmul.f32 %v3093, %v3147
        %v3159 = vmul.f32 %v3094, %v3151
        %v3160 = vmul.f32 %v3095, %v3149
        %v3161 = vmul.f32 %v3096, %v3147
        %v3162 = vmul.f32 %v3097, %v3151
        %v3163 = vmul.f32 %v3098, %v3149
        %v3164 = vmul.f32 %v3099, %v3147
        %v3165 = vmul.f32 %v3100, %v3151
        %v3166 = vmul.f32 %v3101, %v3149
        %v3167 = vmul.f32 %v3102, %v3147
        %v3168 = vmul.f32 %v3103, %v3151
        %v3169 = vmul.f32 %v3104, %v3149
        %v3170 = vmul.f32 %v3105, %v3147
        %v3171 = vmul.f32 %v3106, %v3151
        %v3172 = vmul.f32 %v3107, %v3149
        %v3173 = vmul.f32 %v3108, %v3147
        %v3174 = vmul.f32 %v3109, %v3151
        %v3175 = vmul.f32 %v3110, %v3149
        %v3176 = vmul.f32 %v3111, %v3147
        %v3177 = vmul.f32 %v3112, %v3151
        %v3178 = vmul.f32 %v3113, %v3149
        %v3179 = vmul.f32 %v3114, %v3147
        %v3180 = vmul.f32 %v3115, %v3151
        %v3181 = vmul.f32 %v3116, %v3149
        %v3182 = vmul.f32 %v3117, %v3147
        %v3183 = vmul.f32 %v3118, %v3151
        %v3184 = vmul.f32 %v3119, %v3149
        %v3185 = vmul.f32 %v3120, %v3147
        %v3186 = vmul.f32 %v3121, %v3151
        %v3187 = vmul.f32 %v3122, %v3149
        %v3188 = vmul.f32 %v3123, %v3147
        %v3189 = vmul.f32 %v3124, %v3151
        %v3190 = vmul.f32 %v3125, %v3149
        %3227 = vrot.lane.b32.xlu0 %v3155, 124
        %v3228 = vpop.permute.xlu0 %3227
        %3229 = vrot.lane.b32.xlu0 %v3156, 124
        %v3230 = vpop.permute.xlu0 %3229
        %3231 = vrot.lane.b32.xlu0 %v3157, 124
        %v3232 = vpop.permute.xlu0 %3231
        %3233 = vrot.lane.b32.xlu0 %v3158, 124
        %v3234 = vpop.permute.xlu0 %3233
        %3235 = vrot.lane.b32.xlu0 %v3159, 124
        %v3236 = vpop.permute.xlu0 %3235
        %3237 = vrot.lane.b32.xlu0 %v3160, 124
        %v3238 = vpop.permute.xlu0 %3237
        %3239 = vrot.lane.b32.xlu0 %v3161, 124
        %v3240 = vpop.permute.xlu0 %3239
        %3241 = vrot.lane.b32.xlu0 %v3162, 124
        %v3242 = vpop.permute.xlu0 %3241
        %3243 = vrot.lane.b32.xlu0 %v3163, 124
        %v3244 = vpop.permute.xlu0 %3243
        %3245 = vrot.lane.b32.xlu0 %v3164, 124
        %v3246 = vpop.permute.xlu0 %3245
        %3247 = vrot.lane.b32.xlu0 %v3165, 124
        %v3248 = vpop.permute.xlu0 %3247
        %3249 = vrot.lane.b32.xlu0 %v3166, 124
        %v3250 = vpop.permute.xlu0 %3249
        %3251 = vrot.lane.b32.xlu0 %v3167, 124
        %v3252 = vpop.permute.xlu0 %3251
        %3253 = vrot.lane.b32.xlu0 %v3168, 124
        %v3254 = vpop.permute.xlu0 %3253
        %3255 = vrot.lane.b32.xlu0 %v3169, 124
        %v3256 = vpop.permute.xlu0 %3255
        %3257 = vrot.lane.b32.xlu0 %v3170, 124
        %v3258 = vpop.permute.xlu0 %3257
        %3259 = vrot.lane.b32.xlu0 %v3171, 124
        %v3260 = vpop.permute.xlu0 %3259
        %3261 = vrot.lane.b32.xlu0 %v3172, 124
        %v3262 = vpop.permute.xlu0 %3261
        %3263 = vrot.lane.b32.xlu0 %v3173, 124
        %v3264 = vpop.permute.xlu0 %3263
        %3265 = vrot.lane.b32.xlu0 %v3174, 124
        %v3266 = vpop.permute.xlu0 %3265
        %3267 = vrot.lane.b32.xlu0 %v3175, 124
        %v3268 = vpop.permute.xlu0 %3267
        %3269 = vrot.lane.b32.xlu0 %v3176, 124
        %v3270 = vpop.permute.xlu0 %3269
        %3271 = vrot.lane.b32.xlu0 %v3177, 124
        %v3272 = vpop.permute.xlu0 %3271
        %3273 = vrot.lane.b32.xlu0 %v3178, 124
        %v3274 = vpop.permute.xlu0 %3273
        %3275 = vrot.lane.b32.xlu0 %v3179, 124
        %v3276 = vpop.permute.xlu0 %3275
        %3277 = vrot.lane.b32.xlu0 %v3180, 124
        %v3278 = vpop.permute.xlu0 %3277
        %3279 = vrot.lane.b32.xlu0 %v3181, 124
        %v3280 = vpop.permute.xlu0 %3279
        %3281 = vrot.lane.b32.xlu0 %v3182, 124
        %v3282 = vpop.permute.xlu0 %3281
        %3283 = vrot.lane.b32.xlu0 %v3183, 124
        %v3284 = vpop.permute.xlu0 %3283
        %3285 = vrot.lane.b32.xlu0 %v3184, 124
        %v3286 = vpop.permute.xlu0 %3285
        %3287 = vrot.lane.b32.xlu0 %v3185, 124
        %v3288 = vpop.permute.xlu0 %3287
        %3289 = vrot.lane.b32.xlu0 %v3186, 124
        %v3290 = vpop.permute.xlu0 %3289
        %3291 = vrot.lane.b32.xlu0 %v3187, 124
        %v3292 = vpop.permute.xlu0 %3291
        %3293 = vrot.lane.b32.xlu0 %v3188, 124
        %v3294 = vpop.permute.xlu0 %3293
        %3295 = vrot.lane.b32.xlu0 %v3189, 124
        %v3296 = vpop.permute.xlu0 %3295
        %3297 = vrot.lane.b32.xlu0 %v3190, 124
        %v3298 = vpop.permute.xlu0 %3297
        %vm3299 = vcmask 1014784
        %v3300 = vsel %vm3299, %v3228, %v3230
        %v3301 = vsel %vm3299, %v3230, %v3232
        %v3302 = vsel %vm3299, %v3234, %v3236
        %v3303 = vsel %vm3299, %v3236, %v3238
        %v3304 = vsel %vm3299, %v3240, %v3242
        %v3305 = vsel %vm3299, %v3242, %v3244
        %v3306 = vsel %vm3299, %v3246, %v3248
        %v3307 = vsel %vm3299, %v3248, %v3250
        %v3308 = vsel %vm3299, %v3252, %v3254
        %v3309 = vsel %vm3299, %v3254, %v3256
        %v3310 = vsel %vm3299, %v3258, %v3260
        %v3311 = vsel %vm3299, %v3260, %v3262
        %v3312 = vsel %vm3299, %v3264, %v3266
        %v3313 = vsel %vm3299, %v3266, %v3268
        %v3314 = vsel %vm3299, %v3270, %v3272
        %v3315 = vsel %vm3299, %v3272, %v3274
        %v3316 = vsel %vm3299, %v3276, %v3278
        %v3317 = vsel %vm3299, %v3278, %v3280
        %v3318 = vsel %vm3299, %v3282, %v3284
        %v3319 = vsel %vm3299, %v3284, %v3286
        %v3320 = vsel %vm3299, %v3288, %v3290
        %v3321 = vsel %vm3299, %v3290, %v3292
        %v3322 = vsel %vm3299, %v3294, %v3296
        %v3323 = vsel %vm3299, %v3296, %v3298
        %v3348 = vadd.f32 %v2406, %v3300
        %v3349 = vadd.f32 %v2407, %v3301
        %v3350 = vadd.f32 %v2408, %v3302
        %v3351 = vadd.f32 %v2409, %v3303
        %v3352 = vadd.f32 %v2410, %v3304
        %v3353 = vadd.f32 %v2411, %v3305
        %v3354 = vadd.f32 %v2412, %v3306
        %v3355 = vadd.f32 %v2413, %v3307
        %v3356 = vadd.f32 %v2414, %v3308
        %v3357 = vadd.f32 %v2415, %v3309
        %v3358 = vadd.f32 %v2416, %v3310
        %v3359 = vadd.f32 %v2417, %v3311
        %v3360 = vadd.f32 %v2418, %v3312
        %v3361 = vadd.f32 %v2419, %v3313
        %v3362 = vadd.f32 %v2420, %v3314
        %v3363 = vadd.f32 %v2421, %v3315
        %v3364 = vadd.f32 %v2422, %v3316
        %v3365 = vadd.f32 %v2423, %v3317
        %v3366 = vadd.f32 %v2424, %v3318
        %v3367 = vadd.f32 %v2425, %v3319
        %v3368 = vadd.f32 %v2426, %v3320
        %v3369 = vadd.f32 %v2427, %v3321
        %v3370 = vadd.f32 %v2428, %v3322
        %v3371 = vadd.f32 %v2429, %v3323
        %v3372 = vld [vmem:[%s350] sm:$0xff]
        %v3373 = vld [vmem:[%s350 + $0x8] sm:$0xff]
        %v3374 = vld [vmem:[%s350 + $0x10] sm:$0xff]
        %v3375 = vld [vmem:[%s350 + $0x18] sm:$0xff]
        %v3376 = vld [vmem:[%s350 + $0x20] sm:$0xff]
        %v3377 = vld [vmem:[%s350 + $0x28] sm:$0xff]
        %v3378 = vld [vmem:[%s350 + $0x30] sm:$0xff]
        %v3379 = vld [vmem:[%s350 + $0x38] sm:$0xff]
        %v3380 = vld [vmem:[%s350 + $0x40] sm:$0xff]
        %v3381 = vld [vmem:[%s350 + $0x48] sm:$0xff]
        %v3382 = vld [vmem:[%s350 + $0x50] sm:$0xff]
        %v3383 = vld [vmem:[%s350 + $0x58] sm:$0xff]
        %3385 = vset.pattern.permute.xlu0 0
        %3386 = vperm.xlu0 %3385, %v3372
        %v3387 = vpop.permute.xlu0 %3386
        %3390 = vset.pattern.permute.xlu0 0
        %3391 = vperm.xlu0 %3390, %v3373
        %v3392 = vpop.permute.xlu0 %3391
        %3395 = vset.pattern.permute.xlu0 0
        %3396 = vperm.xlu0 %3395, %v3374
        %v3397 = vpop.permute.xlu0 %3396
        %3400 = vset.pattern.permute.xlu0 0
        %3401 = vperm.xlu0 %3400, %v3375
        %v3402 = vpop.permute.xlu0 %3401
        %3405 = vset.pattern.permute.xlu0 0
        %3406 = vperm.xlu0 %3405, %v3376
        %v3407 = vpop.permute.xlu0 %3406
        %3410 = vset.pattern.permute.xlu0 0
        %3411 = vperm.xlu0 %3410, %v3377
        %v3412 = vpop.permute.xlu0 %3411
        %3415 = vset.pattern.permute.xlu0 0
        %3416 = vperm.xlu0 %3415, %v3378
        %v3417 = vpop.permute.xlu0 %3416
        %3420 = vset.pattern.permute.xlu0 0
        %3421 = vperm.xlu0 %3420, %v3379
        %v3422 = vpop.permute.xlu0 %3421
        %3425 = vset.pattern.permute.xlu0 0
        %3426 = vperm.xlu0 %3425, %v3380
        %v3427 = vpop.permute.xlu0 %3426
        %3430 = vset.pattern.permute.xlu0 0
        %3431 = vperm.xlu0 %3430, %v3381
        %v3432 = vpop.permute.xlu0 %3431
        %3435 = vset.pattern.permute.xlu0 0
        %3436 = vperm.xlu0 %3435, %v3382
        %v3437 = vpop.permute.xlu0 %3436
        %3440 = vset.pattern.permute.xlu0 0
        %3441 = vperm.xlu0 %3440, %v3383
        %v3442 = vpop.permute.xlu0 %3441
        %v3444 = vadd.f32 %v3348, %v3387
        %v3445 = vadd.f32 %v3349, %v3387
        %v3446 = vadd.f32 %v3350, %v3392
        %v3447 = vadd.f32 %v3351, %v3392
        %v3448 = vadd.f32 %v3352, %v3397
        %v3449 = vadd.f32 %v3353, %v3397
        %v3450 = vadd.f32 %v3354, %v3402
        %v3451 = vadd.f32 %v3355, %v3402
        %v3452 = vadd.f32 %v3356, %v3407
        %v3453 = vadd.f32 %v3357, %v3407
        %v3454 = vadd.f32 %v3358, %v3412
        %v3455 = vadd.f32 %v3359, %v3412
        %v3456 = vadd.f32 %v3360, %v3417
        %v3457 = vadd.f32 %v3361, %v3417
        %v3458 = vadd.f32 %v3362, %v3422
        %v3459 = vadd.f32 %v3363, %v3422
        %v3460 = vadd.f32 %v3364, %v3427
        %v3461 = vadd.f32 %v3365, %v3427
        %v3462 = vadd.f32 %v3366, %v3432
        %v3463 = vadd.f32 %v3367, %v3432
        %v3464 = vadd.f32 %v3368, %v3437
        %v3465 = vadd.f32 %v3369, %v3437
        %v3466 = vadd.f32 %v3370, %v3442
        %v3467 = vadd.f32 %v3371, %v3442
        %v3468 = vpack.c.bf16 %v3446, %v3444
        %v3469 = vpack.c.bf16 %v3447, %v3445
        %v3470 = vpack.c.bf16 %v3450, %v3448
        %v3471 = vpack.c.bf16 %v3451, %v3449
        %v3472 = vpack.c.bf16 %v3454, %v3452
        %v3473 = vpack.c.bf16 %v3455, %v3453
        %v3474 = vpack.c.bf16 %v3458, %v3456
        %v3475 = vpack.c.bf16 %v3459, %v3457
        %v3476 = vpack.c.bf16 %v3462, %v3460
        %v3477 = vpack.c.bf16 %v3463, %v3461
        %v3478 = vpack.c.bf16 %v3466, %v3464
        %v3479 = vpack.c.bf16 %v3467, %v3465
        %v3492 = vunpack.c.l.b16 %v3468
        %v3493 = vunpack.c.l.b16 %v3469
        %v3494 = vunpack.c.h.b16 %v3468
        %v3495 = vunpack.c.h.b16 %v3469
        %v3496 = vunpack.c.l.b16 %v3470
        %v3497 = vunpack.c.l.b16 %v3471
        %v3498 = vunpack.c.h.b16 %v3470
        %v3499 = vunpack.c.h.b16 %v3471
        %v3500 = vunpack.c.l.b16 %v3472
        %v3501 = vunpack.c.l.b16 %v3473
        %v3502 = vunpack.c.h.b16 %v3472
        %v3503 = vunpack.c.h.b16 %v3473
        %v3504 = vunpack.c.l.b16 %v3474
        %v3505 = vunpack.c.l.b16 %v3475
        %v3506 = vunpack.c.h.b16 %v3474
        %v3507 = vunpack.c.h.b16 %v3475
        %v3508 = vunpack.c.l.b16 %v3476
        %v3509 = vunpack.c.l.b16 %v3477
        %v3510 = vunpack.c.h.b16 %v3476
        %v3511 = vunpack.c.h.b16 %v3477
        %v3512 = vunpack.c.l.b16 %v3478
        %v3513 = vunpack.c.l.b16 %v3479
        %v3514 = vunpack.c.h.b16 %v3478
        %v3515 = vunpack.c.h.b16 %v3479
        %v3516 = vpack.c.b16 %v3493, %v3492
        %v3517 = vpack.c.b16 %v3495, %v3494
        %v3518 = vpack.c.b16 %v3497, %v3496
        %v3519 = vpack.c.b16 %v3499, %v3498
        %v3520 = vpack.c.b16 %v3501, %v3500
        %v3521 = vpack.c.b16 %v3503, %v3502
        %v3522 = vpack.c.b16 %v3505, %v3504
        %v3523 = vpack.c.b16 %v3507, %v3506
        %v3524 = vpack.c.b16 %v3509, %v3508
        %v3525 = vpack.c.b16 %v3511, %v3510
        %v3526 = vpack.c.b16 %v3513, %v3512
        %v3527 = vpack.c.b16 %v3515, %v3514
        %3540 = vst [vmem:[%s322] sm:$0xff] %v3516
        %3541 = vst [vmem:[%s322 + $0x8] sm:$0xff] %v3517
        %3542 = vst [vmem:[%s322 + $0x10] sm:$0xff] %v3518
        %3543 = vst [vmem:[%s322 + $0x18] sm:$0xff] %v3519
        %3544 = vst [vmem:[%s322 + $0x20] sm:$0xff] %v3520
        %3545 = vst [vmem:[%s322 + $0x28] sm:$0xff] %v3521
        %3546 = vst [vmem:[%s322 + $0x30] sm:$0xff] %v3522
        %3547 = vst [vmem:[%s322 + $0x38] sm:$0xff] %v3523
        %3548 = vst [vmem:[%s322 + $0x40] sm:$0xff] %v3524
        %3549 = vst [vmem:[%s322 + $0x48] sm:$0xff] %v3525
        %3550 = vst [vmem:[%s322 + $0x50] sm:$0xff] %v3526
        %3551 = vst [vmem:[%s322 + $0x58] sm:$0xff] %v3527
        %s3552 = sand.u32 %s193, 1
        %s3553 = scalar_lea.sflag [#allocation4], %s3552
        %s3554 = sand.u32 %s193, 1
        %s3555 = smul.addr %s3554, 96
        %s3556 = scalar_lea.vmem [#allocation3], %s3555
        // Predicated region
        $region45: #{tpu_custom_call.1} parent=43 // pred_check
          %p3557 = pneg %p203
        $region46: #{tpu_custom_call.1} parent=43 // pred_check_branch
          %3559 = sbr.rel (%p3557) target = $region48
        $region47: #{tpu_custom_call.1} parent=43 // pred_region
          %s3560 = smul.u32 12, %s25
          %s3562 = ssub.s32 1536, 1536
          %3563 = vsyncadd %s3553, %s3562
          %s3564 = smul.addr %s3560, 2
          %s3565 = smul.addr %s24, 24
          %s3566 = sadd.s32 %s3564, %s3565
          %s3567 = smul.addr %s3566, 64
          %s3568 = scalar_lea.hbm %s6, %s3567
          %s3569 = sshll.u32 %s3556, 4
          %s3570 = int_to_ptr.vmem [resolvable:$true] %s3569
          %3575 = dma.vmem_to_hbm [thread:$0]  %s3570, 1536, %s3568, %s3553, 128, 128, 8
        $region48: #{tpu_custom_call.1} parent=43 // pred_fallthru
          _
      $region44: #{tpu_custom_call.1} parent=5 // pred_fallthru
        _
      %p3576 = scmp.le.s32.totalorder 2, %s15
      // Predicated region
      $region49: #{tpu_custom_call.1} parent=5 // pred_check
        %p3577 = pneg %p3576
      $region50: #{tpu_custom_call.1} parent=5 // pred_check_branch
        %3579 = sbr.rel (%p3577) target = $region52
      $region51: #{tpu_custom_call.1} parent=5 // pred_region
        %s3580 = ssub.s32 %s15, 2
        // Predicated region
        $region53: #{tpu_custom_call.1} parent=51 // pred_check
          %p3581 = pneg %p209
        $region54: #{tpu_custom_call.1} parent=51 // pred_check_branch
          %3583 = sbr.rel (%p3581) target = $region56
        $region55: #{tpu_custom_call.1} parent=51 // pred_region
          %s3584 = sand.u32 %s194, 1
          %s3585 = scalar_lea.sflag [#allocation4], %s3584
          %s3586 = sand.u32 %s194, 1
          %s3587 = smul.addr %s3586, 96
          %s3588 = scalar_lea.vmem [#allocation3], %s3587
          %3589 = dma.done %s3585, 1536
        $region56: #{tpu_custom_call.1} parent=51 // pred_fallthru
          _
      $region52: #{tpu_custom_call.1} parent=5 // pred_fallthru
        _
    $region6: #{tpu_custom_call.1} parent=1 // loop_footer
      %s19 = sadd.s32 1, %s15
    $region7: #{tpu_custom_call.1} parent=1 // loop_footer_branch
      %14 = sbr.rel target = $region3
    $region8: #{tpu_custom_call.1} parent=1 // loop_exit
      _
    %3590 = vsyncpa [#allocation4], 1
    %s3591 = scalar_lea.sflag [#allocation4], 1
    %3592 = vsyncpa %s3591, 1

</llo_original>
